<compile_context>
chip_gen: v5e
topology: v5e:2x2
jax: 0.10.0
libtpu: 0.0.40
codegen_flags: <defaults>
</compile_context>

<pallas_src>
import functools

import jax
import jax.numpy as jnp
from jax import lax
from jax.experimental import pallas as pl
from jax.experimental.pallas import tpu as pltpu


# ---------------------------------------------------------------------------
# One fused kernel: qkv 1x1 conv + dw 3x3 conv + channel attention + proj.
# Processes one batch element per grid step; layout is (channels, H*W).
# ---------------------------------------------------------------------------
def _fused_attention_kernel(x_ref, wqkv_ref, bqkv_ref, wdw_ref, bdw_ref,
                            temp_ref, wproj_ref, bproj_ref, dwmask_ref,
                            hbias_ref, o_ref, *, H, W, C, num_heads):
    HW = H * W
    f32 = jnp.float32
    bf16 = jnp.bfloat16

    # ---- 1x1 qkv conv on the MXU: bf16 operands, f32 accumulation ----------
    x_bf = x_ref[...].astype(bf16)                                    # (C, HW)
    qkv = jnp.dot(wqkv_ref[...], x_bf, preferred_element_type=f32)    # (3C, HW)
    qkv = qkv + bqkv_ref[...]                                         # f32

    # ---- 3x3 depthwise conv (pad=1): 9 lane-rolls + hoisted boundary masks -
    # output[c, p] = sum_{ky,kx} w[c, ky*3+kx] * qkv[c, p + (ky-1)*W + (kx-1)]
    # with zero OOB taps.  Validity masks are precomputed (1.0/0.0) in the
    # wrapper; the always-valid center tap and the dw bias seed the accumulator.
    wdw = wdw_ref[...]                                                # (3C, 9) f32
    acc = qkv * wdw[:, 4:5] + bdw_ref[...]                            # (3C, HW)
    for ky in range(3):
        for kx in range(3):
            t = 3 * ky + kx
            if t == 4:
                continue                                              # center tap done
            d = (ky - 1) * W + (kx - 1)
            shifted = pltpu.roll(qkv, (-d) % HW, 1)
            acc = acc + (shifted * dwmask_ref[t:t + 1, :]) * wdw[:, t:t + 1]

    q = acc[:C, :]
    k = acc[C:2 * C, :]
    v = acc[2 * C:, :]

    # ---- deferred L2 normalization + temperature (scales on (C,C) only) ----
    eps2 = 1e-24  # (F.normalize default eps = 1e-12) ** 2
    row_scale = lax.rsqrt(
        jnp.maximum(jnp.sum(q * q, axis=-1, keepdims=True), eps2)) \
        * temp_ref[...]                                               # (C, 1)
    # (1, C) per-k-channel inverse norm, produced without any transpose via a
    # ones-row MXU reduction over the lane (HW) axis.
    ones_row = jnp.ones((1, HW), f32)
    sumk2_row = lax.dot_general(ones_row, k * k, (((1,), (1,)), ((), ())),
                                preferred_element_type=f32)           # (1, C)
    col_scale = lax.rsqrt(jnp.maximum(sumk2_row, eps2))               # (1, C)

    # ---- merged-head channel attention, precomputed block-diag bias --------
    logits = lax.dot_general(q.astype(bf16), k.astype(bf16),
                             (((1,), (1,)), ((), ())),
                             preferred_element_type=f32)              # (C, C)
    logits = logits * row_scale * col_scale + hbias_ref[...]          # additive mask
    m = jnp.max(logits, axis=-1, keepdims=True)
    p = jnp.exp(logits - m)
    p = p * pl.reciprocal(jnp.sum(p, axis=-1, keepdims=True), approx=True)

    # ---- reassociated epilogue: (w_proj @ p) @ v + b ------------------------
    m_proj = jnp.dot(wproj_ref[...], p, preferred_element_type=f32)   # (C, C)
    y = jnp.dot(m_proj.astype(bf16), v.astype(bf16),
                preferred_element_type=f32)                           # (C, HW)
    y = y + bproj_ref[...]
    o_ref[...] = y.astype(o_ref.dtype)


# ---------------------------------------------------------------------------
# Wrapper: single pallas_call, channel-first layout end-to-end (no transposes).
# Grid-invariant masks / biases are precomputed here (not per grid step).
# ---------------------------------------------------------------------------
def attention_forward(x_nchw, params, num_heads):
    B, C, H, W = x_nchw.shape
    assert C % num_heads == 0
    HW = H * W
    ch = C // num_heads
    # NOTE: HW % 128 == 0 keeps the output stores lane-dense (perf, not
    # correctness).

    x = x_nchw.reshape(B, C, HW)  # free reshape; channels stay leading

    # Per-channel temperature column (head value replicated over its channels).
    temp_col = jnp.repeat(params["temperature"].reshape(num_heads), ch
                          ).reshape(C, 1).astype(jnp.float32)

    # 9 boundary-validity masks for the depthwise conv taps, shape (9, HW).
    pos = jnp.arange(HW, dtype=jnp.int32)
    hh, ww = pos // W, pos % W
    masks = []
    for ky in range(3):
        for kx in range(3):
            dy, dx = ky - 1, kx - 1
            ok = (hh + dy >= 0) & (hh + dy < H) & (ww + dx >= 0) & (ww + dx < W)
            masks.append(ok.astype(jnp.float32))
    dw_mask = jnp.stack(masks, axis=0)                                # (9, HW)

    # Block-diagonal additive head mask: 0 within a head, -1e30 across heads.
    head_id = jnp.arange(C, dtype=jnp.int32) // ch
    hbias = jnp.where(head_id[:, None] == head_id[None, :], 0.0, -1e30
                      ).astype(jnp.float32)                           # (C, C)

    # Cast the big matmul weight once outside the grid.
    w_qkv_bf = params["w_qkv"].astype(jnp.bfloat16)

    kern = functools.partial(_fused_attention_kernel,
                             H=H, W=W, C=C, num_heads=num_heads)

    def const2d(shape):
        return pl.BlockSpec(shape, lambda b: (0, 0))

    # Raise the scoped VMEM limit above the 16/32 MiB defaults, with headroom,
    # but never past the smallest physical VMEM (v7x: 64 MiB).
    vmem_bytes = int(min(64 * 2**20, max(32 * 2**20, 32 * C * HW * 4)))

    out = pl.pallas_call(
        kern,
        out_shape=jax.ShapeDtypeStruct((B, C, HW), x_nchw.dtype),
        grid_spec=pltpu.PrefetchScalarGridSpec(
            num_scalar_prefetch=0,
            grid=(B,),
            in_specs=[
                pl.BlockSpec((None, C, HW), lambda b: (b, 0, 0)),  # x
                const2d((3 * C, C)),                               # w_qkv (bf16)
                const2d((3 * C, 1)),                               # b_qkv
                const2d((3 * C, 9)),                               # w_dw (col = ky*3+kx)
                const2d((3 * C, 1)),                               # b_dw
                const2d((C, 1)),                                   # temperature / channel
                const2d((C, C)),                                   # w_proj
                const2d((C, 1)),                                   # b_proj
                const2d((9, HW)),                                  # dw validity masks
                const2d((C, C)),                                   # block-diag bias
            ],
            out_specs=pl.BlockSpec((None, C, HW), lambda b: (b, 0, 0)),
        ),
        compiler_params=pltpu.CompilerParams(
            dimension_semantics=("parallel",),   # batch splits across TCs
            vmem_limit_bytes=vmem_bytes),
    )(x, w_qkv_bf, params["b_qkv"], params["w_dw"], params["b_dw"],
      temp_col, params["w_proj"], params["b_proj"], dw_mask, hbias)
    return out.reshape(B, C, H, W)


# ---------------------------------------------------------------------------
# Pure-JAX reference (matches the PyTorch Attention.forward semantics)
# ---------------------------------------------------------------------------
def attention_reference(x_nchw, params, num_heads):
    B, C, H, W = x_nchw.shape
    ch = C // num_heads
    HW = H * W
    x2 = x_nchw.reshape(B, C, HW)
    qkv = jnp.einsum("oc,bcp->bop", params["w_qkv"], x2) + params["b_qkv"][None]
    qkv = qkv.reshape(B, 3 * C, H, W)
    xp = jnp.pad(qkv, ((0, 0), (0, 0), (1, 1), (1, 1)))
    dw = jnp.zeros_like(qkv)
    for ky in range(3):
        for kx in range(3):
            dw = dw + xp[:, :, ky:ky + H, kx:kx + W] * \
                params["w_dw"][:, 3 * ky + kx].reshape(1, 3 * C, 1, 1)
    dw = dw + params["b_dw"].reshape(1, 3 * C, 1, 1)
    q, k, v = jnp.split(dw.reshape(B, 3 * C, HW), 3, axis=1)
    q = q.reshape(B, num_heads, ch, HW)
    k = k.reshape(B, num_heads, ch, HW)
    v = v.reshape(B, num_heads, ch, HW)
    qn = q / jnp.maximum(jnp.linalg.norm(q, axis=-1, keepdims=True), 1e-12)
    kn = k / jnp.maximum(jnp.linalg.norm(k, axis=-1, keepdims=True), 1e-12)
    attn = jnp.einsum("bhcp,bhdp->bhcd", qn, kn) \
        * params["temperature"].reshape(1, num_heads, 1, 1)
    attn = jax.nn.softmax(attn, axis=-1)
    out = jnp.einsum("bhcd,bhdp->bhcp", attn, v).reshape(B, C, HW)
    y = jnp.einsum("oc,bcp->bop", params["w_proj"], out) + params["b_proj"][None]
    return y.reshape(B, C, H, W)


def init_params(key, dim, num_heads, dtype=jnp.float32):
    # Synthetic deterministic init, stored in the PyTorch (out, in) layout:
    # w_qkv  <-> Conv2d(dim, 3*dim, 1).weight[:, :, 0, 0]               -> (3*dim, dim)
    # w_dw   <-> Conv2d(3*dim, 3*dim, 3, groups=3*dim).weight[:, 0, ky, kx] -> col ky*3+kx
    # w_proj <-> Conv2d(dim, dim, 1).weight[:, :, 0, 0]                 -> (dim, dim)
    k1, k2, k3, k4, k5, k6 = jax.random.split(key, 6)
    s = 0.1
    return {
        "w_qkv": jax.random.normal(k1, (3 * dim, dim), dtype) * s,
        "b_qkv": jax.random.normal(k2, (3 * dim, 1), dtype) * s,
        "w_dw": jax.random.normal(k3, (3 * dim, 9), dtype) * s,
        "b_dw": jax.random.normal(k4, (3 * dim, 1), dtype) * s,
        "w_proj": jax.random.normal(k5, (dim, dim), dtype) * s,
        "b_proj": jax.random.normal(k6, (dim, 1), dtype) * s,
        "temperature": jnp.ones((num_heads,), dtype),  # nn.Parameter(ones(heads,1,1))
    }


if __name__ == "__main__":
    dim, num_heads = 32, 4
    B, H, W = 2, 16, 16

    key = jax.random.PRNGKey(0)
    k_x, k_p = jax.random.split(key)
    x = jax.random.normal(k_x, (B, dim, H, W), jnp.float32)
    params = init_params(k_p, dim, num_heads)

    fwd = jax.jit(lambda xx, pp: attention_forward(xx, pp, num_heads))
    y = fwd(x, params)
    jax.block_until_ready(y)

    assert y.shape == (B, dim, H, W), y.shape
    assert bool(jnp.all(jnp.isfinite(y)))

    # Validate against a pure-JAX f32 reference of the PyTorch module.
    # Tolerance reflects bf16 MXU operands + approx softmax reciprocal.
    y_ref = attention_reference(x, params, num_heads)
    max_err = float(jnp.max(jnp.abs(y - y_ref)))
    assert jnp.allclose(y, y_ref, atol=5e-2, rtol=5e-2), f"max_abs_err={max_err}"
    print("KERNEL_OK")
</pallas_src>

<mosaic_0001>
module attributes {stable_mosaic.version = 11 : i64} {
  func.func @_fused_attention_kernel(%arg0: i32, %arg1: memref<1x32x256xf32, #tpu.memory_space<vmem>>, %arg2: memref<96x32xbf16, #tpu.memory_space<vmem>>, %arg3: memref<96x1xf32, #tpu.memory_space<vmem>>, %arg4: memref<96x9xf32, #tpu.memory_space<vmem>>, %arg5: memref<96x1xf32, #tpu.memory_space<vmem>>, %arg6: memref<32x1xf32, #tpu.memory_space<vmem>>, %arg7: memref<32x32xf32, #tpu.memory_space<vmem>>, %arg8: memref<32x1xf32, #tpu.memory_space<vmem>>, %arg9: memref<9x256xf32, #tpu.memory_space<vmem>>, %arg10: memref<32x32xf32, #tpu.memory_space<vmem>>, %arg11: memref<1x32x256xf32, #tpu.memory_space<vmem>>) attributes {dimension_semantics = [#tpu.dimension_semantics<parallel>], iteration_bounds = array<i64: 2>, scalar_prefetch = 0 : i64, scratch_operands = 0 : i64, tpu.core_type = #tpu.core_type<tc>, window_params = [{transform_indices = @transform_0, window_bounds = array<i64: 1, 32, 256>}, {pipeline_mode = #tpu.pipeline_mode<synchronous>, transform_indices = @transform_1, window_bounds = array<i64: 96, 32>}, {pipeline_mode = #tpu.pipeline_mode<synchronous>, transform_indices = @transform_2, window_bounds = array<i64: 96, 1>}, {pipeline_mode = #tpu.pipeline_mode<synchronous>, transform_indices = @transform_3, window_bounds = array<i64: 96, 9>}, {pipeline_mode = #tpu.pipeline_mode<synchronous>, transform_indices = @transform_4, window_bounds = array<i64: 96, 1>}, {pipeline_mode = #tpu.pipeline_mode<synchronous>, transform_indices = @transform_5, window_bounds = array<i64: 32, 1>}, {pipeline_mode = #tpu.pipeline_mode<synchronous>, transform_indices = @transform_6, window_bounds = array<i64: 32, 32>}, {pipeline_mode = #tpu.pipeline_mode<synchronous>, transform_indices = @transform_7, window_bounds = array<i64: 32, 1>}, {pipeline_mode = #tpu.pipeline_mode<synchronous>, transform_indices = @transform_8, window_bounds = array<i64: 9, 256>}, {pipeline_mode = #tpu.pipeline_mode<synchronous>, transform_indices = @transform_9, window_bounds = array<i64: 32, 32>}, {transform_indices = @transform_10, window_bounds = array<i64: 1, 32, 256>}]} {
    %c0 = arith.constant 0 : index
    %c0_0 = arith.constant 0 : index
    %c0_1 = arith.constant 0 : index
    %0 = vector.load %arg1[%c0, %c0_0, %c0_1] : memref<1x32x256xf32, #tpu.memory_space<vmem>>, vector<1x32x256xf32>
    %1 = vector.shape_cast %0 : vector<1x32x256xf32> to vector<32x256xf32>
    %2 = arith.truncf %1 : vector<32x256xf32> to vector<32x256xbf16>
    %c0_2 = arith.constant 0 : index
    %c0_3 = arith.constant 0 : index
    %3 = vector.load %arg2[%c0_2, %c0_3] : memref<96x32xbf16, #tpu.memory_space<vmem>>, vector<96x32xbf16>
    %cst = arith.constant dense<0.000000e+00> : vector<96x256xf32>
    %4 = tpu.matmul %3, %2, %cst {dimension_numbers = #tpu.dot_dimension_numbers<[1], [0], [0], [1], [0, 0, 1, 1], [], []>} : vector<96x32xbf16>, vector<32x256xbf16>, vector<96x256xf32> -> vector<96x256xf32>
    %c0_4 = arith.constant 0 : index
    %c0_5 = arith.constant 0 : index
    %5 = vector.load %arg3[%c0_4, %c0_5] : memref<96x1xf32, #tpu.memory_space<vmem>>, vector<96x1xf32>
    %6 = vector.broadcast %5 : vector<96x1xf32> to vector<96x256xf32>
    %7 = arith.addf %4, %6 : vector<96x256xf32>
    %c0_6 = arith.constant 0 : index
    %c0_7 = arith.constant 0 : index
    %8 = vector.load %arg4[%c0_6, %c0_7] : memref<96x9xf32, #tpu.memory_space<vmem>>, vector<96x9xf32>
    %9 = vector.extract_strided_slice %8 {offsets = [0, 4], sizes = [96, 1], strides = [1, 1]} : vector<96x9xf32> to vector<96x1xf32>
    %10 = vector.broadcast %9 : vector<96x1xf32> to vector<96x256xf32>
    %11 = arith.mulf %7, %10 : vector<96x256xf32>
    %c0_8 = arith.constant 0 : index
    %c0_9 = arith.constant 0 : index
    %12 = vector.load %arg5[%c0_8, %c0_9] : memref<96x1xf32, #tpu.memory_space<vmem>>, vector<96x1xf32>
    %13 = vector.broadcast %12 : vector<96x1xf32> to vector<96x256xf32>
    %14 = arith.addf %11, %13 : vector<96x256xf32>
    %c17_i32 = arith.constant 17 : i32
    %15 = tpu.dynamic_rotate %7 by %c17_i32 dim 1 : vector<96x256xf32>, i32 -> vector<96x256xf32>
    %c0_10 = arith.constant 0 : index
    %c0_11 = arith.constant 0 : index
    %16 = vector.load %arg9[%c0_10, %c0_11] : memref<9x256xf32, #tpu.memory_space<vmem>>, vector<1x256xf32>
    %17 = vector.broadcast %16 : vector<1x256xf32> to vector<96x256xf32>
    %18 = arith.mulf %15, %17 : vector<96x256xf32>
    %19 = vector.extract_strided_slice %8 {offsets = [0, 0], sizes = [96, 1], strides = [1, 1]} : vector<96x9xf32> to vector<96x1xf32>
    %20 = vector.broadcast %19 : vector<96x1xf32> to vector<96x256xf32>
    %21 = arith.mulf %18, %20 : vector<96x256xf32>
    %22 = arith.addf %14, %21 : vector<96x256xf32>
    %c16_i32 = arith.constant 16 : i32
    %23 = tpu.dynamic_rotate %7 by %c16_i32 dim 1 : vector<96x256xf32>, i32 -> vector<96x256xf32>
    %c1 = arith.constant 1 : index
    %c0_12 = arith.constant 0 : index
    %24 = vector.load %arg9[%c1, %c0_12] : memref<9x256xf32, #tpu.memory_space<vmem>>, vector<1x256xf32>
    %25 = vector.broadcast %24 : vector<1x256xf32> to vector<96x256xf32>
    %26 = arith.mulf %23, %25 : vector<96x256xf32>
    %27 = vector.extract_strided_slice %8 {offsets = [0, 1], sizes = [96, 1], strides = [1, 1]} : vector<96x9xf32> to vector<96x1xf32>
    %28 = vector.broadcast %27 : vector<96x1xf32> to vector<96x256xf32>
    %29 = arith.mulf %26, %28 : vector<96x256xf32>
    %30 = arith.addf %22, %29 : vector<96x256xf32>
    %c15_i32 = arith.constant 15 : i32
    %31 = tpu.dynamic_rotate %7 by %c15_i32 dim 1 : vector<96x256xf32>, i32 -> vector<96x256xf32>
    %c2 = arith.constant 2 : index
    %c0_13 = arith.constant 0 : index
    %32 = vector.load %arg9[%c2, %c0_13] : memref<9x256xf32, #tpu.memory_space<vmem>>, vector<1x256xf32>
    %33 = vector.broadcast %32 : vector<1x256xf32> to vector<96x256xf32>
    %34 = arith.mulf %31, %33 : vector<96x256xf32>
    %35 = vector.extract_strided_slice %8 {offsets = [0, 2], sizes = [96, 1], strides = [1, 1]} : vector<96x9xf32> to vector<96x1xf32>
    %36 = vector.broadcast %35 : vector<96x1xf32> to vector<96x256xf32>
    %37 = arith.mulf %34, %36 : vector<96x256xf32>
    %38 = arith.addf %30, %37 : vector<96x256xf32>
    %c1_i32 = arith.constant 1 : i32
    %39 = tpu.dynamic_rotate %7 by %c1_i32 dim 1 : vector<96x256xf32>, i32 -> vector<96x256xf32>
    %c3 = arith.constant 3 : index
    %c0_14 = arith.constant 0 : index
    %40 = vector.load %arg9[%c3, %c0_14] : memref<9x256xf32, #tpu.memory_space<vmem>>, vector<1x256xf32>
    %41 = vector.broadcast %40 : vector<1x256xf32> to vector<96x256xf32>
    %42 = arith.mulf %39, %41 : vector<96x256xf32>
    %43 = vector.extract_strided_slice %8 {offsets = [0, 3], sizes = [96, 1], strides = [1, 1]} : vector<96x9xf32> to vector<96x1xf32>
    %44 = vector.broadcast %43 : vector<96x1xf32> to vector<96x256xf32>
    %45 = arith.mulf %42, %44 : vector<96x256xf32>
    %46 = arith.addf %38, %45 : vector<96x256xf32>
    %c255_i32 = arith.constant 255 : i32
    %47 = tpu.dynamic_rotate %7 by %c255_i32 dim 1 : vector<96x256xf32>, i32 -> vector<96x256xf32>
    %c5 = arith.constant 5 : index
    %c0_15 = arith.constant 0 : index
    %48 = vector.load %arg9[%c5, %c0_15] : memref<9x256xf32, #tpu.memory_space<vmem>>, vector<1x256xf32>
    %49 = vector.broadcast %48 : vector<1x256xf32> to vector<96x256xf32>
    %50 = arith.mulf %47, %49 : vector<96x256xf32>
    %51 = vector.extract_strided_slice %8 {offsets = [0, 5], sizes = [96, 1], strides = [1, 1]} : vector<96x9xf32> to vector<96x1xf32>
    %52 = vector.broadcast %51 : vector<96x1xf32> to vector<96x256xf32>
    %53 = arith.mulf %50, %52 : vector<96x256xf32>
    %54 = arith.addf %46, %53 : vector<96x256xf32>
    %c241_i32 = arith.constant 241 : i32
    %55 = tpu.dynamic_rotate %7 by %c241_i32 dim 1 : vector<96x256xf32>, i32 -> vector<96x256xf32>
    %c6 = arith.constant 6 : index
    %c0_16 = arith.constant 0 : index
    %56 = vector.load %arg9[%c6, %c0_16] : memref<9x256xf32, #tpu.memory_space<vmem>>, vector<1x256xf32>
    %57 = vector.broadcast %56 : vector<1x256xf32> to vector<96x256xf32>
    %58 = arith.mulf %55, %57 : vector<96x256xf32>
    %59 = vector.extract_strided_slice %8 {offsets = [0, 6], sizes = [96, 1], strides = [1, 1]} : vector<96x9xf32> to vector<96x1xf32>
    %60 = vector.broadcast %59 : vector<96x1xf32> to vector<96x256xf32>
    %61 = arith.mulf %58, %60 : vector<96x256xf32>
    %62 = arith.addf %54, %61 : vector<96x256xf32>
    %c240_i32 = arith.constant 240 : i32
    %63 = tpu.dynamic_rotate %7 by %c240_i32 dim 1 : vector<96x256xf32>, i32 -> vector<96x256xf32>
    %c7 = arith.constant 7 : index
    %c0_17 = arith.constant 0 : index
    %64 = vector.load %arg9[%c7, %c0_17] : memref<9x256xf32, #tpu.memory_space<vmem>>, vector<1x256xf32>
    %65 = vector.broadcast %64 : vector<1x256xf32> to vector<96x256xf32>
    %66 = arith.mulf %63, %65 : vector<96x256xf32>
    %67 = vector.extract_strided_slice %8 {offsets = [0, 7], sizes = [96, 1], strides = [1, 1]} : vector<96x9xf32> to vector<96x1xf32>
    %68 = vector.broadcast %67 : vector<96x1xf32> to vector<96x256xf32>
    %69 = arith.mulf %66, %68 : vector<96x256xf32>
    %70 = arith.addf %62, %69 : vector<96x256xf32>
    %c239_i32 = arith.constant 239 : i32
    %71 = tpu.dynamic_rotate %7 by %c239_i32 dim 1 : vector<96x256xf32>, i32 -> vector<96x256xf32>
    %c8 = arith.constant 8 : index
    %c0_18 = arith.constant 0 : index
    %72 = vector.load %arg9[%c8, %c0_18] : memref<9x256xf32, #tpu.memory_space<vmem>>, vector<1x256xf32>
    %73 = vector.broadcast %72 : vector<1x256xf32> to vector<96x256xf32>
    %74 = arith.mulf %71, %73 : vector<96x256xf32>
    %75 = vector.extract_strided_slice %8 {offsets = [0, 8], sizes = [96, 1], strides = [1, 1]} : vector<96x9xf32> to vector<96x1xf32>
    %76 = vector.broadcast %75 : vector<96x1xf32> to vector<96x256xf32>
    %77 = arith.mulf %74, %76 : vector<96x256xf32>
    %78 = arith.addf %70, %77 : vector<96x256xf32>
    %79 = vector.extract_strided_slice %78 {offsets = [0, 0], sizes = [32, 256], strides = [1, 1]} : vector<96x256xf32> to vector<32x256xf32>
    %80 = vector.extract_strided_slice %78 {offsets = [32, 0], sizes = [32, 256], strides = [1, 1]} : vector<96x256xf32> to vector<32x256xf32>
    %81 = vector.extract_strided_slice %78 {offsets = [64, 0], sizes = [32, 256], strides = [1, 1]} : vector<96x256xf32> to vector<32x256xf32>
    %82 = arith.mulf %79, %79 : vector<32x256xf32>
    %cst_19 = arith.constant dense<0.000000e+00> : vector<32xf32>
    %83 = vector.multi_reduction <add>, %82, %cst_19 [1] : vector<32x256xf32> to vector<32xf32>
    %84 = vector.shape_cast %83 : vector<32xf32> to vector<32x1xf32>
    %cst_20 = arith.constant 1.000000e-24 : f32
    %85 = vector.broadcast %cst_20 : f32 to vector<32x1xf32>
    %86 = arith.maximumf %84, %85 : vector<32x1xf32>
    %87 = math.rsqrt %86 : vector<32x1xf32>
    %c0_21 = arith.constant 0 : index
    %c0_22 = arith.constant 0 : index
    %88 = vector.load %arg6[%c0_21, %c0_22] : memref<32x1xf32, #tpu.memory_space<vmem>>, vector<32x1xf32>
    %89 = arith.mulf %87, %88 : vector<32x1xf32>
    %cst_23 = arith.constant 1.000000e+00 : f32
    %90 = vector.broadcast %cst_23 : f32 to vector<1x256xf32>
    %91 = arith.mulf %80, %80 : vector<32x256xf32>
    %cst_24 = arith.constant dense<0.000000e+00> : vector<1x32xf32>
    %92 = tpu.matmul %90, %91, %cst_24 {dimension_numbers = #tpu.dot_dimension_numbers<[1], [1], [0], [0], [0, 0, 1, 0], [], []>} : vector<1x256xf32>, vector<32x256xf32>, vector<1x32xf32> -> vector<1x32xf32>
    %cst_25 = arith.constant 1.000000e-24 : f32
    %93 = vector.broadcast %cst_25 : f32 to vector<1x32xf32>
    %94 = arith.maximumf %92, %93 : vector<1x32xf32>
    %95 = math.rsqrt %94 : vector<1x32xf32>
    %96 = arith.truncf %79 : vector<32x256xf32> to vector<32x256xbf16>
    %97 = arith.truncf %80 : vector<32x256xf32> to vector<32x256xbf16>
    %cst_26 = arith.constant dense<0.000000e+00> : vector<32x32xf32>
    %98 = tpu.matmul %96, %97, %cst_26 {dimension_numbers = #tpu.dot_dimension_numbers<[1], [1], [0], [0], [0, 0, 1, 0], [], []>} : vector<32x256xbf16>, vector<32x256xbf16>, vector<32x32xf32> -> vector<32x32xf32>
    %99 = vector.broadcast %89 : vector<32x1xf32> to vector<32x32xf32>
    %100 = arith.mulf %98, %99 : vector<32x32xf32>
    %101 = vector.broadcast %95 : vector<1x32xf32> to vector<32x32xf32>
    %102 = arith.mulf %100, %101 : vector<32x32xf32>
    %c0_27 = arith.constant 0 : index
    %c0_28 = arith.constant 0 : index
    %103 = vector.load %arg10[%c0_27, %c0_28] : memref<32x32xf32, #tpu.memory_space<vmem>>, vector<32x32xf32>
    %104 = arith.addf %102, %103 : vector<32x32xf32>
    %cst_29 = arith.constant dense<0xFF800000> : vector<32xf32>
    %105 = vector.multi_reduction <maximumf>, %104, %cst_29 [1] : vector<32x32xf32> to vector<32xf32>
    %106 = vector.shape_cast %105 : vector<32xf32> to vector<32x1xf32>
    %107 = vector.broadcast %106 : vector<32x1xf32> to vector<32x32xf32>
    %108 = arith.subf %104, %107 : vector<32x32xf32>
    %109 = math.exp %108 : vector<32x32xf32>
    %cst_30 = arith.constant dense<0.000000e+00> : vector<32xf32>
    %110 = vector.multi_reduction <add>, %109, %cst_30 [1] : vector<32x32xf32> to vector<32xf32>
    %111 = vector.shape_cast %110 : vector<32xf32> to vector<32x1xf32>
    %112 = tpu.reciprocal %111 {approx = true} : vector<32x1xf32> -> vector<32x1xf32>
    %113 = vector.broadcast %112 : vector<32x1xf32> to vector<32x32xf32>
    %114 = arith.mulf %109, %113 : vector<32x32xf32>
    %c0_31 = arith.constant 0 : index
    %c0_32 = arith.constant 0 : index
    %115 = vector.load %arg7[%c0_31, %c0_32] : memref<32x32xf32, #tpu.memory_space<vmem>>, vector<32x32xf32>
    %cst_33 = arith.constant dense<0.000000e+00> : vector<32x32xf32>
    %116 = tpu.matmul %115, %114, %cst_33 {dimension_numbers = #tpu.dot_dimension_numbers<[1], [0], [0], [1], [0, 0, 1, 1], [], []>} : vector<32x32xf32>, vector<32x32xf32>, vector<32x32xf32> -> vector<32x32xf32>
    %117 = arith.truncf %116 : vector<32x32xf32> to vector<32x32xbf16>
    %118 = arith.truncf %81 : vector<32x256xf32> to vector<32x256xbf16>
    %cst_34 = arith.constant dense<0.000000e+00> : vector<32x256xf32>
    %119 = tpu.matmul %117, %118, %cst_34 {dimension_numbers = #tpu.dot_dimension_numbers<[1], [0], [0], [1], [0, 0, 1, 1], [], []>} : vector<32x32xbf16>, vector<32x256xbf16>, vector<32x256xf32> -> vector<32x256xf32>
    %c0_35 = arith.constant 0 : index
    %c0_36 = arith.constant 0 : index
    %120 = vector.load %arg8[%c0_35, %c0_36] : memref<32x1xf32, #tpu.memory_space<vmem>>, vector<32x1xf32>
    %121 = vector.broadcast %120 : vector<32x1xf32> to vector<32x256xf32>
    %122 = arith.addf %119, %121 : vector<32x256xf32>
    %c0_37 = arith.constant 0 : index
    %c0_38 = arith.constant 0 : index
    %c0_39 = arith.constant 0 : index
    %123 = vector.load %arg11[%c0_37, %c0_38, %c0_39] : memref<1x32x256xf32, #tpu.memory_space<vmem>>, vector<1x32x256xf32>
    %124 = vector.shape_cast %123 : vector<1x32x256xf32> to vector<32x256xf32>
    %125 = vector.shape_cast %122 : vector<32x256xf32> to vector<1x32x256xf32>
    tpu.vector_store %arg11[%c0_37, %c0_38, %c0_39], %125 {strides = array<i32>} : memref<1x32x256xf32, #tpu.memory_space<vmem>>, vector<1x32x256xf32>,
    return
  }
  func.func @transform_0(%arg0: i32) -> (i32, i32, i32) {
    %c0_i32 = arith.constant 0 : i32
    %c0_i32_0 = arith.constant 0 : i32
    %c0_i32_1 = arith.constant 0 : i32
    return %arg0, %c0_i32, %c0_i32_0 : i32, i32, i32
  }
  func.func @transform_1(%arg0: i32) -> (i32, i32) {
    %c0_i32 = arith.constant 0 : i32
    %c0_i32_0 = arith.constant 0 : i32
    %c0_i32_1 = arith.constant 0 : i32
    return %c0_i32, %c0_i32_0 : i32, i32
  }
  func.func @transform_2(%arg0: i32) -> (i32, i32) {
    %c0_i32 = arith.constant 0 : i32
    %c0_i32_0 = arith.constant 0 : i32
    %c0_i32_1 = arith.constant 0 : i32
    return %c0_i32, %c0_i32_0 : i32, i32
  }
  func.func @transform_3(%arg0: i32) -> (i32, i32) {
    %c0_i32 = arith.constant 0 : i32
    %c0_i32_0 = arith.constant 0 : i32
    %c0_i32_1 = arith.constant 0 : i32
    return %c0_i32, %c0_i32_0 : i32, i32
  }
  func.func @transform_4(%arg0: i32) -> (i32, i32) {
    %c0_i32 = arith.constant 0 : i32
    %c0_i32_0 = arith.constant 0 : i32
    %c0_i32_1 = arith.constant 0 : i32
    return %c0_i32, %c0_i32_0 : i32, i32
  }
  func.func @transform_5(%arg0: i32) -> (i32, i32) {
    %c0_i32 = arith.constant 0 : i32
    %c0_i32_0 = arith.constant 0 : i32
    %c0_i32_1 = arith.constant 0 : i32
    return %c0_i32, %c0_i32_0 : i32, i32
  }
  func.func @transform_6(%arg0: i32) -> (i32, i32) {
    %c0_i32 = arith.constant 0 : i32
    %c0_i32_0 = arith.constant 0 : i32
    %c0_i32_1 = arith.constant 0 : i32
    return %c0_i32, %c0_i32_0 : i32, i32
  }
  func.func @transform_7(%arg0: i32) -> (i32, i32) {
    %c0_i32 = arith.constant 0 : i32
    %c0_i32_0 = arith.constant 0 : i32
    %c0_i32_1 = arith.constant 0 : i32
    return %c0_i32, %c0_i32_0 : i32, i32
  }
  func.func @transform_8(%arg0: i32) -> (i32, i32) {
    %c0_i32 = arith.constant 0 : i32
    %c0_i32_0 = arith.constant 0 : i32
    %c0_i32_1 = arith.constant 0 : i32
    return %c0_i32, %c0_i32_0 : i32, i32
  }
  func.func @transform_9(%arg0: i32) -> (i32, i32) {
    %c0_i32 = arith.constant 0 : i32
    %c0_i32_0 = arith.constant 0 : i32
    %c0_i32_1 = arith.constant 0 : i32
    return %c0_i32, %c0_i32_0 : i32, i32
  }
  func.func @transform_10(%arg0: i32) -> (i32, i32, i32) {
    %c0_i32 = arith.constant 0 : i32
    %c0_i32_0 = arith.constant 0 : i32
    %c0_i32_1 = arith.constant 0 : i32
    return %arg0, %c0_i32, %c0_i32_0 : i32, i32, i32
  }
}

</mosaic_0001>

<llo_original>
// kernel: _lambda_.1
$region0: #{_lambda_.1}
  #allocation0 [shape = 'u32[]', space=smem, size = 0x4, offset = 0x4, fixed_abs, tag = 'smem constant byte address 0x4 - core index']
  #allocation1 [shape = 'u32[72,128]{1,0:T(1,128)}', space=vmem, size = 0x9000, scoped, tag = 'internal scratch']
  %s0 = inlined_call_operand.vmem [shape: f32[2,32,256], index: 0, kind: input, shape index: {}]
  %s1 = inlined_call_operand.vmem [shape: bf16[96,32], index: 1, kind: input, shape index: {}]
  %s2 = inlined_call_operand.vmem [shape: f32[96,1], index: 2, kind: input, shape index: {}]
  %s3 = inlined_call_operand.vmem [shape: f32[96,9], index: 3, kind: input, shape index: {}]
  %s4 = inlined_call_operand.vmem [shape: f32[96,1], index: 4, kind: input, shape index: {}]
  %s5 = inlined_call_operand.vmem [shape: f32[32,1], index: 5, kind: input, shape index: {}]
  %s6 = inlined_call_operand.vmem [shape: f32[32,32], index: 6, kind: input, shape index: {}]
  %s7 = inlined_call_operand.vmem [shape: f32[32,1], index: 7, kind: input, shape index: {}]
  %s8 = inlined_call_operand.vmem [shape: f32[9,256], index: 8, kind: input, shape index: {}]
  %s9 = inlined_call_operand.vmem [shape: f32[32,32], index: 9, kind: input, shape index: {}]
  %s10 = inlined_call_operand.vmem [shape: f32[2,32,256], index: 10, kind: output, shape index: {}]
  %s11 = sld [smem:[#allocation0]]
  $region73: #{_lambda_.1} parent=0
    _
  %s13 = ssub.s32 1, %s11
  %s14 = scalar_select 0, %s13, %s11
  loop: start=0, step=1, limit=4
  $region2: #{_lambda_.1} parent=0 // loop_pre_header
    _
  $region3: #{_lambda_.1} parent=0 // loop_header
    %s16 = sphi 0, %s20
    %p17 = scmp.ge.s32.totalorder %s16, 4
    %s26 = sphi 0, %s28
    %s29 = sphi 0, %s26
    %s30 = sphi 0, %s29
    %s46 = sphi 0, %s30
    %s50 = sphi 0, %s50
    %s52 = sphi 0, %s50
    %s53 = sphi 0, %s52
    %s67 = sphi 0, %s53
    %s71 = sphi 0, %s71
    %s73 = sphi 0, %s71
    %s74 = sphi 0, %s73
    %s88 = sphi 0, %s74
    %s92 = sphi 0, %s92
    %s94 = sphi 0, %s92
    %s95 = sphi 0, %s94
    %s109 = sphi 0, %s95
    %s113 = sphi 0, %s113
    %s115 = sphi 0, %s113
    %s116 = sphi 0, %s115
    %s130 = sphi 0, %s116
    %s134 = sphi 0, %s134
    %s136 = sphi 0, %s134
    %s137 = sphi 0, %s136
    %s151 = sphi 0, %s137
    %s155 = sphi 0, %s155
    %s157 = sphi 0, %s155
    %s158 = sphi 0, %s157
    %s172 = sphi 0, %s158
    %s176 = sphi 0, %s176
    %s178 = sphi 0, %s176
    %s179 = sphi 0, %s178
    %s193 = sphi 0, %s179
    %s197 = sphi 0, %s197
    %s199 = sphi 0, %s197
    %s200 = sphi 0, %s199
    %s214 = sphi 0, %s200
    %s218 = sphi 0, %s218
    %s220 = sphi 0, %s218
    %s221 = sphi 0, %s220
    %s235 = sphi 0, %s221
    %s241 = sphi 0, %s243
    %s244 = sphi 0, %s241
    %s245 = sphi 0, %s244
    %s261 = sphi 0, %s245
  $region4: #{_lambda_.1} parent=0 // loop_header_branch
    %19 = sbr.rel (%p17) target = $region8
  $region5: #{_lambda_.1} parent=0 // loop_body
    %s21 = ssub.s32 %s16, 1
    %s22 = ssub.s32 %s16, 2
    %s23 = sadd.s32 %s16, 1
    %s24 = ssub.s32 %s16, %s23
    %p25 = scmp.eq.s32.totalorder %s24, 0
    %s27 = sadd.s32 %s26, 1
    %s28 = scalar_select %p25, %s26, %s27
    %p31 = pneg %p25
    %p32 = scmp.eq.s32.totalorder %s16, 1
    %p33 = por %p31, %p32
    %p34 = scmp.ne.s32.totalorder %s26, %s29
    %p35 = scmp.eq.s32.totalorder %s16, 0
    %p36 = por %p34, %p35
    %p37 = scmp.ne.s32.totalorder %s26, %s29
    %p38 = scmp.eq.s32.totalorder %s21, 1
    %p39 = por %p37, %p38
    %p40 = scmp.ne.s32.totalorder %s29, %s30
    %p41 = scmp.eq.s32.totalorder %s21, 0
    %p42 = por %p40, %p41
    %p43 = scmp.ne.s32.totalorder %s29, %s30
    %p44 = scmp.eq.s32.totalorder %s22, 1
    %p45 = por %p43, %p44
    %p47 = scmp.ne.s32.totalorder %s30, %s46
    %p48 = scmp.eq.s32.totalorder %s22, 0
    %p49 = por %p47, %p48
    %s51 = sadd.s32 %s50, 1
    %p54 = scmp.eq.s32.totalorder %s16, 1
    %p55 = scmp.ne.s32.totalorder %s50, %s52
    %p56 = scmp.eq.s32.totalorder %s16, 0
    %p57 = por %p55, %p56
    %p58 = scmp.ne.s32.totalorder %s50, %s52
    %p59 = scmp.eq.s32.totalorder %s21, 1
    %p60 = por %p58, %p59
    %p61 = scmp.ne.s32.totalorder %s52, %s53
    %p62 = scmp.eq.s32.totalorder %s21, 0
    %p63 = por %p61, %p62
    %p64 = scmp.ne.s32.totalorder %s52, %s53
    %p65 = scmp.eq.s32.totalorder %s22, 1
    %p66 = por %p64, %p65
    %p68 = scmp.ne.s32.totalorder %s53, %s67
    %p69 = scmp.eq.s32.totalorder %s22, 0
    %p70 = por %p68, %p69
    %s72 = sadd.s32 %s71, 1
    %p75 = scmp.eq.s32.totalorder %s16, 1
    %p76 = scmp.ne.s32.totalorder %s71, %s73
    %p77 = scmp.eq.s32.totalorder %s16, 0
    %p78 = por %p76, %p77
    %p79 = scmp.ne.s32.totalorder %s71, %s73
    %p80 = scmp.eq.s32.totalorder %s21, 1
    %p81 = por %p79, %p80
    %p82 = scmp.ne.s32.totalorder %s73, %s74
    %p83 = scmp.eq.s32.totalorder %s21, 0
    %p84 = por %p82, %p83
    %p85 = scmp.ne.s32.totalorder %s73, %s74
    %p86 = scmp.eq.s32.totalorder %s22, 1
    %p87 = por %p85, %p86
    %p89 = scmp.ne.s32.totalorder %s74, %s88
    %p90 = scmp.eq.s32.totalorder %s22, 0
    %p91 = por %p89, %p90
    %s93 = sadd.s32 %s92, 1
    %p96 = scmp.eq.s32.totalorder %s16, 1
    %p97 = scmp.ne.s32.totalorder %s92, %s94
    %p98 = scmp.eq.s32.totalorder %s16, 0
    %p99 = por %p97, %p98
    %p100 = scmp.ne.s32.totalorder %s92, %s94
    %p101 = scmp.eq.s32.totalorder %s21, 1
    %p102 = por %p100, %p101
    %p103 = scmp.ne.s32.totalorder %s94, %s95
    %p104 = scmp.eq.s32.totalorder %s21, 0
    %p105 = por %p103, %p104
    %p106 = scmp.ne.s32.totalorder %s94, %s95
    %p107 = scmp.eq.s32.totalorder %s22, 1
    %p108 = por %p106, %p107
    %p110 = scmp.ne.s32.totalorder %s95, %s109
    %p111 = scmp.eq.s32.totalorder %s22, 0
    %p112 = por %p110, %p111
    %s114 = sadd.s32 %s113, 1
    %p117 = scmp.eq.s32.totalorder %s16, 1
    %p118 = scmp.ne.s32.totalorder %s113, %s115
    %p119 = scmp.eq.s32.totalorder %s16, 0
    %p120 = por %p118, %p119
    %p121 = scmp.ne.s32.totalorder %s113, %s115
    %p122 = scmp.eq.s32.totalorder %s21, 1
    %p123 = por %p121, %p122
    %p124 = scmp.ne.s32.totalorder %s115, %s116
    %p125 = scmp.eq.s32.totalorder %s21, 0
    %p126 = por %p124, %p125
    %p127 = scmp.ne.s32.totalorder %s115, %s116
    %p128 = scmp.eq.s32.totalorder %s22, 1
    %p129 = por %p127, %p128
    %p131 = scmp.ne.s32.totalorder %s116, %s130
    %p132 = scmp.eq.s32.totalorder %s22, 0
    %p133 = por %p131, %p132
    %s135 = sadd.s32 %s134, 1
    %p138 = scmp.eq.s32.totalorder %s16, 1
    %p139 = scmp.ne.s32.totalorder %s134, %s136
    %p140 = scmp.eq.s32.totalorder %s16, 0
    %p141 = por %p139, %p140
    %p142 = scmp.ne.s32.totalorder %s134, %s136
    %p143 = scmp.eq.s32.totalorder %s21, 1
    %p144 = por %p142, %p143
    %p145 = scmp.ne.s32.totalorder %s136, %s137
    %p146 = scmp.eq.s32.totalorder %s21, 0
    %p147 = por %p145, %p146
    %p148 = scmp.ne.s32.totalorder %s136, %s137
    %p149 = scmp.eq.s32.totalorder %s22, 1
    %p150 = por %p148, %p149
    %p152 = scmp.ne.s32.totalorder %s137, %s151
    %p153 = scmp.eq.s32.totalorder %s22, 0
    %p154 = por %p152, %p153
    %s156 = sadd.s32 %s155, 1
    %p159 = scmp.eq.s32.totalorder %s16, 1
    %p160 = scmp.ne.s32.totalorder %s155, %s157
    %p161 = scmp.eq.s32.totalorder %s16, 0
    %p162 = por %p160, %p161
    %p163 = scmp.ne.s32.totalorder %s155, %s157
    %p164 = scmp.eq.s32.totalorder %s21, 1
    %p165 = por %p163, %p164
    %p166 = scmp.ne.s32.totalorder %s157, %s158
    %p167 = scmp.eq.s32.totalorder %s21, 0
    %p168 = por %p166, %p167
    %p169 = scmp.ne.s32.totalorder %s157, %s158
    %p170 = scmp.eq.s32.totalorder %s22, 1
    %p171 = por %p169, %p170
    %p173 = scmp.ne.s32.totalorder %s158, %s172
    %p174 = scmp.eq.s32.totalorder %s22, 0
    %p175 = por %p173, %p174
    %s177 = sadd.s32 %s176, 1
    %p180 = scmp.eq.s32.totalorder %s16, 1
    %p181 = scmp.ne.s32.totalorder %s176, %s178
    %p182 = scmp.eq.s32.totalorder %s16, 0
    %p183 = por %p181, %p182
    %p184 = scmp.ne.s32.totalorder %s176, %s178
    %p185 = scmp.eq.s32.totalorder %s21, 1
    %p186 = por %p184, %p185
    %p187 = scmp.ne.s32.totalorder %s178, %s179
    %p188 = scmp.eq.s32.totalorder %s21, 0
    %p189 = por %p187, %p188
    %p190 = scmp.ne.s32.totalorder %s178, %s179
    %p191 = scmp.eq.s32.totalorder %s22, 1
    %p192 = por %p190, %p191
    %p194 = scmp.ne.s32.totalorder %s179, %s193
    %p195 = scmp.eq.s32.totalorder %s22, 0
    %p196 = por %p194, %p195
    %s198 = sadd.s32 %s197, 1
    %p201 = scmp.eq.s32.totalorder %s16, 1
    %p202 = scmp.ne.s32.totalorder %s197, %s199
    %p203 = scmp.eq.s32.totalorder %s16, 0
    %p204 = por %p202, %p203
    %p205 = scmp.ne.s32.totalorder %s197, %s199
    %p206 = scmp.eq.s32.totalorder %s21, 1
    %p207 = por %p205, %p206
    %p208 = scmp.ne.s32.totalorder %s199, %s200
    %p209 = scmp.eq.s32.totalorder %s21, 0
    %p210 = por %p208, %p209
    %p211 = scmp.ne.s32.totalorder %s199, %s200
    %p212 = scmp.eq.s32.totalorder %s22, 1
    %p213 = por %p211, %p212
    %p215 = scmp.ne.s32.totalorder %s200, %s214
    %p216 = scmp.eq.s32.totalorder %s22, 0
    %p217 = por %p215, %p216
    %s219 = sadd.s32 %s218, 1
    %p222 = scmp.eq.s32.totalorder %s16, 1
    %p223 = scmp.ne.s32.totalorder %s218, %s220
    %p224 = scmp.eq.s32.totalorder %s16, 0
    %p225 = por %p223, %p224
    %p226 = scmp.ne.s32.totalorder %s218, %s220
    %p227 = scmp.eq.s32.totalorder %s21, 1
    %p228 = por %p226, %p227
    %p229 = scmp.ne.s32.totalorder %s220, %s221
    %p230 = scmp.eq.s32.totalorder %s21, 0
    %p231 = por %p229, %p230
    %p232 = scmp.ne.s32.totalorder %s220, %s221
    %p233 = scmp.eq.s32.totalorder %s22, 1
    %p234 = por %p232, %p233
    %p236 = scmp.ne.s32.totalorder %s221, %s235
    %p237 = scmp.eq.s32.totalorder %s22, 0
    %p238 = por %p236, %p237
    %s239 = ssub.s32 %s16, %s23
    %p240 = scmp.eq.s32.totalorder %s239, 0
    %s242 = sadd.s32 %s241, 1
    %s243 = scalar_select %p240, %s241, %s242
    %p246 = pneg %p240
    %p247 = scmp.eq.s32.totalorder %s16, 1
    %p248 = por %p246, %p247
    %p249 = scmp.ne.s32.totalorder %s241, %s244
    %p250 = scmp.eq.s32.totalorder %s16, 0
    %p251 = por %p249, %p250
    %p252 = scmp.ne.s32.totalorder %s241, %s244
    %p253 = scmp.eq.s32.totalorder %s21, 1
    %p254 = por %p252, %p253
    %p255 = scmp.ne.s32.totalorder %s244, %s245
    %p256 = scmp.eq.s32.totalorder %s21, 0
    %p257 = por %p255, %p256
    %p258 = scmp.ne.s32.totalorder %s244, %s245
    %p259 = scmp.eq.s32.totalorder %s22, 1
    %p260 = por %p258, %p259
    %p262 = scmp.ne.s32.totalorder %s245, %s261
    %p263 = scmp.eq.s32.totalorder %s22, 0
    %p264 = por %p262, %p263
    %p265 = scmp.le.s32.totalorder 1, %s16
    %p266 = scmp.lt.s32.totalorder %s16, 3
    %p267 = pnand %p265, %p266
    %p268 = pneg %p267
    // Predicated region
    $region9: #{_lambda_.1} parent=5 // pred_check
      _
    $region10: #{_lambda_.1} parent=5 // pred_check_branch
      %270 = sbr.rel (%p267) target = $region12
    $region11: #{_lambda_.1} parent=5 // pred_region
      %s271 = ssub.s32 %s16, 1
      // Predicated region
      $region13: #{_lambda_.1} parent=11 // pred_check
        %p272 = pneg %p63
      $region14: #{_lambda_.1} parent=11 // pred_check_branch
        %274 = sbr.rel (%p272) target = $region16
      $region15: #{_lambda_.1} parent=11 // pred_region
        _
      $region16: #{_lambda_.1} parent=11 // pred_fallthru
        _
      // Predicated region
      $region17: #{_lambda_.1} parent=11 // pred_check
        %p275 = pneg %p84
      $region18: #{_lambda_.1} parent=11 // pred_check_branch
        %277 = sbr.rel (%p275) target = $region20
      $region19: #{_lambda_.1} parent=11 // pred_region
        _
      $region20: #{_lambda_.1} parent=11 // pred_fallthru
        _
      // Predicated region
      $region21: #{_lambda_.1} parent=11 // pred_check
        %p278 = pneg %p105
      $region22: #{_lambda_.1} parent=11 // pred_check_branch
        %280 = sbr.rel (%p278) target = $region24
      $region23: #{_lambda_.1} parent=11 // pred_region
        _
      $region24: #{_lambda_.1} parent=11 // pred_fallthru
        _
      // Predicated region
      $region25: #{_lambda_.1} parent=11 // pred_check
        %p281 = pneg %p126
      $region26: #{_lambda_.1} parent=11 // pred_check_branch
        %283 = sbr.rel (%p281) target = $region28
      $region27: #{_lambda_.1} parent=11 // pred_region
        _
      $region28: #{_lambda_.1} parent=11 // pred_fallthru
        _
      // Predicated region
      $region29: #{_lambda_.1} parent=11 // pred_check
        %p284 = pneg %p147
      $region30: #{_lambda_.1} parent=11 // pred_check_branch
        %286 = sbr.rel (%p284) target = $region32
      $region31: #{_lambda_.1} parent=11 // pred_region
        _
      $region32: #{_lambda_.1} parent=11 // pred_fallthru
        _
      // Predicated region
      $region33: #{_lambda_.1} parent=11 // pred_check
        %p287 = pneg %p168
      $region34: #{_lambda_.1} parent=11 // pred_check_branch
        %289 = sbr.rel (%p287) target = $region36
      $region35: #{_lambda_.1} parent=11 // pred_region
        _
      $region36: #{_lambda_.1} parent=11 // pred_fallthru
        _
      // Predicated region
      $region37: #{_lambda_.1} parent=11 // pred_check
        %p290 = pneg %p189
      $region38: #{_lambda_.1} parent=11 // pred_check_branch
        %292 = sbr.rel (%p290) target = $region40
      $region39: #{_lambda_.1} parent=11 // pred_region
        _
      $region40: #{_lambda_.1} parent=11 // pred_fallthru
        _
      // Predicated region
      $region41: #{_lambda_.1} parent=11 // pred_check
        %p293 = pneg %p210
      $region42: #{_lambda_.1} parent=11 // pred_check_branch
        %295 = sbr.rel (%p293) target = $region44
      $region43: #{_lambda_.1} parent=11 // pred_region
        _
      $region44: #{_lambda_.1} parent=11 // pred_fallthru
        _
      // Predicated region
      $region45: #{_lambda_.1} parent=11 // pred_check
        %p296 = pneg %p231
      $region46: #{_lambda_.1} parent=11 // pred_check_branch
        %298 = sbr.rel (%p296) target = $region48
      $region47: #{_lambda_.1} parent=11 // pred_region
        _
      $region48: #{_lambda_.1} parent=11 // pred_fallthru
        _
    $region12: #{_lambda_.1} parent=5 // pred_fallthru
      _
    %p299 = scmp.lt.s32.totalorder %s16, 2
    // Predicated region
    $region49: #{_lambda_.1} parent=5 // pred_check
      %p300 = pneg %p299
    $region50: #{_lambda_.1} parent=5 // pred_check_branch
      %302 = sbr.rel (%p300) target = $region52
    $region51: #{_lambda_.1} parent=5 // pred_region
      // Predicated region
      $region53: #{_lambda_.1} parent=51 // pred_check
        %p303 = pneg %p36
      $region54: #{_lambda_.1} parent=51 // pred_check_branch
        %305 = sbr.rel (%p303) target = $region56
      $region55: #{_lambda_.1} parent=51 // pred_region
        %p306 = scmp.lt.s32.totalorder %s16, 1
        %s307 = scalar_select %p306, %s16, 1
        %s308 = smul.addr %s307, 8
        %s309 = smul.addr %s308, 8
        %s310 = scalar_lea.vmem %s0, %s309
      $region56: #{_lambda_.1} parent=51 // pred_fallthru
        _
    $region52: #{_lambda_.1} parent=5 // pred_fallthru
      _
    %p311 = scmp.le.s32.totalorder 1, %s16
    %p312 = scmp.lt.s32.totalorder %s16, 3
    %p313 = pnand %p311, %p312
    %p314 = pneg %p313
    // Predicated region
    $region57: #{_lambda_.1} parent=5 // pred_check
      _
    $region58: #{_lambda_.1} parent=5 // pred_check_branch
      %316 = sbr.rel (%p313) target = $region60
    $region59: #{_lambda_.1} parent=5 // pred_region
      %s317 = ssub.s32 %s16, 1
      %p318 = scmp.lt.s32.totalorder %s21, 1
      %s319 = scalar_select %p318, %s21, 1
      %s320 = smul.addr %s319, 8
      %s321 = smul.addr %s320, 8
      %s322 = scalar_lea.vmem %s0, %s321
      %p323 = pneg %p42
      %p324 = pneg %p39
      %p325 = pneg %p63
      %p326 = pneg %p60
      %p327 = pneg %p84
      %p328 = pneg %p81
      %p329 = pneg %p105
      %p330 = pneg %p102
      %p331 = pneg %p126
      %p332 = pneg %p123
      %p333 = pneg %p147
      %p334 = pneg %p144
      %p335 = pneg %p168
      %p336 = pneg %p165
      %p337 = pneg %p189
      %p338 = pneg %p186
      %p339 = pneg %p210
      %p340 = pneg %p207
      %p341 = pneg %p231
      %p342 = pneg %p228
      %p343 = pneg %p257
      %p344 = pneg %p254
      %p345 = scmp.lt.s32.totalorder %s21, 1
      %s346 = scalar_select %p345, %s21, 1
      %s347 = smul.addr %s346, 8
      %s348 = smul.addr %s347, 8
      %s349 = scalar_lea.vmem %s10, %s348
      %p350 = scmp.lt.s32.totalorder %s21, 1
      %s351 = scalar_select %p350, %s21, 1
      %s352 = smul.addr %s351, 8
      %s353 = smul.addr %s352, 8
      %s354 = scalar_lea.vmem %s0, %s353
      %p355 = scmp.lt.s32.totalorder %s21, 1
      %s356 = scalar_select %p355, %s21, 1
      %s357 = smul.addr %s356, 8
      %s358 = smul.addr %s357, 8
      %s359 = scalar_lea.vmem %s10, %s358
      %v361 = vld [vmem:[%s354] sm:$0xff]
      %v362 = vld [vmem:[%s354 + $0x8] sm:$0xff]
      %v363 = vld [vmem:[%s354 + $0x10] sm:$0xff]
      %v364 = vld [vmem:[%s354 + $0x18] sm:$0xff]
      %v365 = vld [vmem:[%s354 + $0x20] sm:$0xff]
      %v366 = vld [vmem:[%s354 + $0x28] sm:$0xff]
      %v367 = vld [vmem:[%s354 + $0x30] sm:$0xff]
      %v368 = vld [vmem:[%s354 + $0x38] sm:$0xff]
      %v369 = vpack.c.bf16 %v363, %v361
      %v370 = vpack.c.bf16 %v364, %v362
      %v371 = vpack.c.bf16 %v367, %v365
      %v372 = vpack.c.bf16 %v368, %v366
      %v373 = vld [vmem:[%s1] sm:$0xf]
      %v374 = vld [vmem:[%s1 + $0x4] sm:$0xf]
      %v375 = vld [vmem:[%s1 + $0x8] sm:$0xf]
      %v376 = vld [vmem:[%s1 + $0xc] sm:$0xf]
      %v377 = vld [vmem:[%s1 + $0x10] sm:$0xf]
      %v378 = vld [vmem:[%s1 + $0x14] sm:$0xf]
      %v379 = vld [vmem:[%s1 + $0x18] sm:$0xf]
      %v380 = vld [vmem:[%s1 + $0x1c] sm:$0xf]
      %v381 = vld [vmem:[%s1 + $0x20] sm:$0xf]
      %v382 = vld [vmem:[%s1 + $0x24] sm:$0xf]
      %v383 = vld [vmem:[%s1 + $0x28] sm:$0xf]
      %v384 = vld [vmem:[%s1 + $0x2c] sm:$0xf]
      %v385 = vld [vmem:[%s2] sm:$0xff]
      %v386 = vld [vmem:[%s2 + $0x8] sm:$0xff]
      %v387 = vld [vmem:[%s2 + $0x10] sm:$0xff]
      %v388 = vld [vmem:[%s2 + $0x18] sm:$0xff]
      %v389 = vld [vmem:[%s2 + $0x20] sm:$0xff]
      %v390 = vld [vmem:[%s2 + $0x28] sm:$0xff]
      %v391 = vld [vmem:[%s2 + $0x30] sm:$0xff]
      %v392 = vld [vmem:[%s2 + $0x38] sm:$0xff]
      %v393 = vld [vmem:[%s2 + $0x40] sm:$0xff]
      %v394 = vld [vmem:[%s2 + $0x48] sm:$0xff]
      %v395 = vld [vmem:[%s2 + $0x50] sm:$0xff]
      %v396 = vld [vmem:[%s2 + $0x58] sm:$0xff]
      %398 = vset.pattern.permute.xlu0 0
      %399 = vperm.xlu0 %398, %v385
      %v400 = vpop.permute.xlu0 %399
      %403 = vset.pattern.permute.xlu0 0
      %404 = vperm.xlu0 %403, %v386
      %v405 = vpop.permute.xlu0 %404
      %408 = vset.pattern.permute.xlu0 0
      %409 = vperm.xlu0 %408, %v387
      %v410 = vpop.permute.xlu0 %409
      %413 = vset.pattern.permute.xlu0 0
      %414 = vperm.xlu0 %413, %v388
      %v415 = vpop.permute.xlu0 %414
      %418 = vset.pattern.permute.xlu0 0
      %419 = vperm.xlu0 %418, %v389
      %v420 = vpop.permute.xlu0 %419
      %423 = vset.pattern.permute.xlu0 0
      %424 = vperm.xlu0 %423, %v390
      %v425 = vpop.permute.xlu0 %424
      %428 = vset.pattern.permute.xlu0 0
      %429 = vperm.xlu0 %428, %v391
      %v430 = vpop.permute.xlu0 %429
      %433 = vset.pattern.permute.xlu0 0
      %434 = vperm.xlu0 %433, %v392
      %v435 = vpop.permute.xlu0 %434
      %438 = vset.pattern.permute.xlu0 0
      %439 = vperm.xlu0 %438, %v393
      %v440 = vpop.permute.xlu0 %439
      %443 = vset.pattern.permute.xlu0 0
      %444 = vperm.xlu0 %443, %v394
      %v445 = vpop.permute.xlu0 %444
      %448 = vset.pattern.permute.xlu0 0
      %449 = vperm.xlu0 %448, %v395
      %v450 = vpop.permute.xlu0 %449
      %453 = vset.pattern.permute.xlu0 0
      %454 = vperm.xlu0 %453, %v396
      %v455 = vpop.permute.xlu0 %454
      %v469 = vunpack.c.l.b16 %v373
      %v470 = vunpack.c.l.b16 %v374
      %v471 = vunpack.c.l.b16 %v375
      %v472 = vunpack.c.l.b16 %v376
      %v473 = vunpack.c.l.b16 %v377
      %v474 = vunpack.c.l.b16 %v378
      %v475 = vunpack.c.l.b16 %v379
      %v476 = vunpack.c.l.b16 %v380
      %v477 = vunpack.c.l.b16 %v381
      %v478 = vunpack.c.l.b16 %v382
      %v479 = vunpack.c.l.b16 %v383
      %v480 = vunpack.c.l.b16 %v384
      %v481 = vpack.c.b16 %v470, %v469
      %v482 = vpack.c.b16 %v472, %v471
      %v483 = vpack.c.b16 %v474, %v473
      %v484 = vpack.c.b16 %v476, %v475
      %v485 = vpack.c.b16 %v478, %v477
      %v486 = vpack.c.b16 %v480, %v479
      %vm487 = vcmask 261120
      %v489 = vsel %vm487, %v481, 0
      %v492 = vsel %vm487, %v482, 0
      %v495 = vsel %vm487, %v483, 0
      %v498 = vsel %vm487, %v484, 0
      %v501 = vsel %vm487, %v485, 0
      %v504 = vsel %vm487, %v486, 0
      %506 = vmatpush.bf16.msra.mxu0 0
      %507 = vmatpush.bf16.msra.mxu0 0
      %508 = vmatpush.bf16.msra.mxu0 0
      %509 = vmatpush.bf16.msra.mxu0 0
      %510 = vmatpush.bf16.msra.mxu0 0
      %511 = vmatpush.bf16.msra.mxu0 0
      %512 = vmatpush.bf16.msra.mxu0 %v371
      %513 = vmatpush.bf16.msra.mxu0 %v369
      %514 = vmatmul.bf16.gmra.mxu0 %v489
      %v515 = vpop.f32.mrf.mxu0
      %v516 = vadd.f32 %v400, %v515
      %v517 = vpop.f32.mrf.mxu0
      %v518 = vadd.f32 %v405, %v517
      %519 = vmatmul.bf16.gmra.mxu0 %v492
      %v520 = vpop.f32.mrf.mxu0
      %v521 = vadd.f32 %v410, %v520
      %v522 = vpop.f32.mrf.mxu0
      %v523 = vadd.f32 %v415, %v522
      %524 = vmatmul.bf16.gmra.mxu0 %v495
      %v525 = vpop.f32.mrf.mxu0
      %v526 = vadd.f32 %v420, %v525
      %v527 = vpop.f32.mrf.mxu0
      %v528 = vadd.f32 %v425, %v527
      %529 = vmatmul.bf16.gmra.mxu0 %v498
      %v530 = vpop.f32.mrf.mxu0
      %v531 = vadd.f32 %v430, %v530
      %v532 = vpop.f32.mrf.mxu0
      %v533 = vadd.f32 %v435, %v532
      %534 = vmatmul.bf16.gmra.mxu0 %v501
      %v535 = vpop.f32.mrf.mxu0
      %v536 = vadd.f32 %v440, %v535
      %v537 = vpop.f32.mrf.mxu0
      %v538 = vadd.f32 %v445, %v537
      %539 = vmatmul.bf16.gmra.mxu0 %v504
      %v540 = vpop.f32.mrf.mxu0
      %v541 = vadd.f32 %v450, %v540
      %v542 = vpop.f32.mrf.mxu0
      %v543 = vadd.f32 %v455, %v542
      %544 = vdwg.mxu0
      %545 = vmatpush.bf16.msra.mxu0 0
      %546 = vmatpush.bf16.msra.mxu0 0
      %547 = vmatpush.bf16.msra.mxu0 0
      %548 = vmatpush.bf16.msra.mxu0 0
      %549 = vmatpush.bf16.msra.mxu0 0
      %550 = vmatpush.bf16.msra.mxu0 0
      %551 = vmatpush.bf16.msra.mxu0 %v372
      %552 = vmatpush.bf16.msra.mxu0 %v370
      %553 = vmatmul.bf16.gmra.mxu0 %v489
      %v554 = vpop.f32.mrf.mxu0
      %v555 = vadd.f32 %v400, %v554
      %v556 = vpop.f32.mrf.mxu0
      %v557 = vadd.f32 %v405, %v556
      %558 = vmatmul.bf16.gmra.mxu0 %v492
      %v559 = vpop.f32.mrf.mxu0
      %v560 = vadd.f32 %v410, %v559
      %v561 = vpop.f32.mrf.mxu0
      %v562 = vadd.f32 %v415, %v561
      %563 = vmatmul.bf16.gmra.mxu0 %v495
      %v564 = vpop.f32.mrf.mxu0
      %v565 = vadd.f32 %v420, %v564
      %v566 = vpop.f32.mrf.mxu0
      %v567 = vadd.f32 %v425, %v566
      %568 = vmatmul.bf16.gmra.mxu0 %v498
      %v569 = vpop.f32.mrf.mxu0
      %v570 = vadd.f32 %v430, %v569
      %v571 = vpop.f32.mrf.mxu0
      %v572 = vadd.f32 %v435, %v571
      %573 = vmatmul.bf16.gmra.mxu0 %v501
      %v574 = vpop.f32.mrf.mxu0
      %v575 = vadd.f32 %v440, %v574
      %v576 = vpop.f32.mrf.mxu0
      %v577 = vadd.f32 %v445, %v576
      %578 = vmatmul.bf16.gmra.mxu0 %v504
      %v579 = vpop.f32.mrf.mxu0
      %v580 = vadd.f32 %v450, %v579
      %v581 = vpop.f32.mrf.mxu0
      %v582 = vadd.f32 %v455, %v581
      %583 = vdwg.mxu0
      %v584 = vld [vmem:[%s3] sm:$0xff]
      %v585 = vld [vmem:[%s3 + $0x8] sm:$0xff]
      %v586 = vld [vmem:[%s3 + $0x10] sm:$0xff]
      %v587 = vld [vmem:[%s3 + $0x18] sm:$0xff]
      %v588 = vld [vmem:[%s3 + $0x20] sm:$0xff]
      %v589 = vld [vmem:[%s3 + $0x28] sm:$0xff]
      %v590 = vld [vmem:[%s3 + $0x30] sm:$0xff]
      %v591 = vld [vmem:[%s3 + $0x38] sm:$0xff]
      %v592 = vld [vmem:[%s3 + $0x40] sm:$0xff]
      %v593 = vld [vmem:[%s3 + $0x48] sm:$0xff]
      %v594 = vld [vmem:[%s3 + $0x50] sm:$0xff]
      %v595 = vld [vmem:[%s3 + $0x58] sm:$0xff]
      %597 = vset.pattern.permute.xlu0 4
      %598 = vperm.xlu0 %597, %v584
      %v599 = vpop.permute.xlu0 %598
      %602 = vset.pattern.permute.xlu0 4
      %603 = vperm.xlu0 %602, %v585
      %v604 = vpop.permute.xlu0 %603
      %607 = vset.pattern.permute.xlu0 4
      %608 = vperm.xlu0 %607, %v586
      %v609 = vpop.permute.xlu0 %608
      %612 = vset.pattern.permute.xlu0 4
      %613 = vperm.xlu0 %612, %v587
      %v614 = vpop.permute.xlu0 %613
      %617 = vset.pattern.permute.xlu0 4
      %618 = vperm.xlu0 %617, %v588
      %v619 = vpop.permute.xlu0 %618
      %622 = vset.pattern.permute.xlu0 4
      %623 = vperm.xlu0 %622, %v589
      %v624 = vpop.permute.xlu0 %623
      %627 = vset.pattern.permute.xlu0 4
      %628 = vperm.xlu0 %627, %v590
      %v629 = vpop.permute.xlu0 %628
      %632 = vset.pattern.permute.xlu0 4
      %633 = vperm.xlu0 %632, %v591
      %v634 = vpop.permute.xlu0 %633
      %637 = vset.pattern.permute.xlu0 4
      %638 = vperm.xlu0 %637, %v592
      %v639 = vpop.permute.xlu0 %638
      %642 = vset.pattern.permute.xlu0 4
      %643 = vperm.xlu0 %642, %v593
      %v644 = vpop.permute.xlu0 %643
      %647 = vset.pattern.permute.xlu0 4
      %648 = vperm.xlu0 %647, %v594
      %v649 = vpop.permute.xlu0 %648
      %652 = vset.pattern.permute.xlu0 4
      %653 = vperm.xlu0 %652, %v595
      %v654 = vpop.permute.xlu0 %653
      %v656 = vmul.f32 %v516, %v599
      %v657 = vmul.f32 %v555, %v599
      %v658 = vmul.f32 %v518, %v604
      %v659 = vmul.f32 %v557, %v604
      %v660 = vmul.f32 %v521, %v609
      %v661 = vmul.f32 %v560, %v609
      %v662 = vmul.f32 %v523, %v614
      %v663 = vmul.f32 %v562, %v614
      %v664 = vmul.f32 %v526, %v619
      %v665 = vmul.f32 %v565, %v619
      %v666 = vmul.f32 %v528, %v624
      %v667 = vmul.f32 %v567, %v624
      %v668 = vmul.f32 %v531, %v629
      %v669 = vmul.f32 %v570, %v629
      %v670 = vmul.f32 %v533, %v634
      %v671 = vmul.f32 %v572, %v634
      %v672 = vmul.f32 %v536, %v639
      %v673 = vmul.f32 %v575, %v639
      %v674 = vmul.f32 %v538, %v644
      %v675 = vmul.f32 %v577, %v644
      %v676 = vmul.f32 %v541, %v649
      %v677 = vmul.f32 %v580, %v649
      %v678 = vmul.f32 %v543, %v654
      %v679 = vmul.f32 %v582, %v654
      %v680 = vld [vmem:[%s4] sm:$0xff]
      %v681 = vld [vmem:[%s4 + $0x8] sm:$0xff]
      %v682 = vld [vmem:[%s4 + $0x10] sm:$0xff]
      %v683 = vld [vmem:[%s4 + $0x18] sm:$0xff]
      %v684 = vld [vmem:[%s4 + $0x20] sm:$0xff]
      %v685 = vld [vmem:[%s4 + $0x28] sm:$0xff]
      %v686 = vld [vmem:[%s4 + $0x30] sm:$0xff]
      %v687 = vld [vmem:[%s4 + $0x38] sm:$0xff]
      %v688 = vld [vmem:[%s4 + $0x40] sm:$0xff]
      %v689 = vld [vmem:[%s4 + $0x48] sm:$0xff]
      %v690 = vld [vmem:[%s4 + $0x50] sm:$0xff]
      %v691 = vld [vmem:[%s4 + $0x58] sm:$0xff]
      %693 = vset.pattern.permute.xlu0 0
      %694 = vperm.xlu0 %693, %v680
      %v695 = vpop.permute.xlu0 %694
      %698 = vset.pattern.permute.xlu0 0
      %699 = vperm.xlu0 %698, %v681
      %v700 = vpop.permute.xlu0 %699
      %703 = vset.pattern.permute.xlu0 0
      %704 = vperm.xlu0 %703, %v682
      %v705 = vpop.permute.xlu0 %704
      %708 = vset.pattern.permute.xlu0 0
      %709 = vperm.xlu0 %708, %v683
      %v710 = vpop.permute.xlu0 %709
      %713 = vset.pattern.permute.xlu0 0
      %714 = vperm.xlu0 %713, %v684
      %v715 = vpop.permute.xlu0 %714
      %718 = vset.pattern.permute.xlu0 0
      %719 = vperm.xlu0 %718, %v685
      %v720 = vpop.permute.xlu0 %719
      %723 = vset.pattern.permute.xlu0 0
      %724 = vperm.xlu0 %723, %v686
      %v725 = vpop.permute.xlu0 %724
      %728 = vset.pattern.permute.xlu0 0
      %729 = vperm.xlu0 %728, %v687
      %v730 = vpop.permute.xlu0 %729
      %733 = vset.pattern.permute.xlu0 0
      %734 = vperm.xlu0 %733, %v688
      %v735 = vpop.permute.xlu0 %734
      %738 = vset.pattern.permute.xlu0 0
      %739 = vperm.xlu0 %738, %v689
      %v740 = vpop.permute.xlu0 %739
      %743 = vset.pattern.permute.xlu0 0
      %744 = vperm.xlu0 %743, %v690
      %v745 = vpop.permute.xlu0 %744
      %748 = vset.pattern.permute.xlu0 0
      %749 = vperm.xlu0 %748, %v691
      %v750 = vpop.permute.xlu0 %749
      %v752 = vadd.f32 %v656, %v695
      %v753 = vadd.f32 %v657, %v695
      %v754 = vadd.f32 %v658, %v700
      %v755 = vadd.f32 %v659, %v700
      %v756 = vadd.f32 %v660, %v705
      %v757 = vadd.f32 %v661, %v705
      %v758 = vadd.f32 %v662, %v710
      %v759 = vadd.f32 %v663, %v710
      %v760 = vadd.f32 %v664, %v715
      %v761 = vadd.f32 %v665, %v715
      %v762 = vadd.f32 %v666, %v720
      %v763 = vadd.f32 %v667, %v720
      %v764 = vadd.f32 %v668, %v725
      %v765 = vadd.f32 %v669, %v725
      %v766 = vadd.f32 %v670, %v730
      %v767 = vadd.f32 %v671, %v730
      %v768 = vadd.f32 %v672, %v735
      %v769 = vadd.f32 %v673, %v735
      %v770 = vadd.f32 %v674, %v740
      %v771 = vadd.f32 %v675, %v740
      %v772 = vadd.f32 %v676, %v745
      %v773 = vadd.f32 %v677, %v745
      %v774 = vadd.f32 %v678, %v750
      %v775 = vadd.f32 %v679, %v750
      %776 = vrot.lane.b32.xlu0 %v516, 17
      %v777 = vpop.permute.xlu0 %776
      %778 = vrot.lane.b32.xlu0 %v518, 17
      %v779 = vpop.permute.xlu0 %778
      %780 = vrot.lane.b32.xlu0 %v521, 17
      %v781 = vpop.permute.xlu0 %780
      %782 = vrot.lane.b32.xlu0 %v523, 17
      %v783 = vpop.permute.xlu0 %782
      %784 = vrot.lane.b32.xlu0 %v526, 17
      %v785 = vpop.permute.xlu0 %784
      %786 = vrot.lane.b32.xlu0 %v528, 17
      %v787 = vpop.permute.xlu0 %786
      %788 = vrot.lane.b32.xlu0 %v531, 17
      %v789 = vpop.permute.xlu0 %788
      %790 = vrot.lane.b32.xlu0 %v533, 17
      %v791 = vpop.permute.xlu0 %790
      %792 = vrot.lane.b32.xlu0 %v536, 17
      %v793 = vpop.permute.xlu0 %792
      %794 = vrot.lane.b32.xlu0 %v538, 17
      %v795 = vpop.permute.xlu0 %794
      %796 = vrot.lane.b32.xlu0 %v541, 17
      %v797 = vpop.permute.xlu0 %796
      %798 = vrot.lane.b32.xlu0 %v543, 17
      %v799 = vpop.permute.xlu0 %798
      %800 = vrot.lane.b32.xlu0 %v555, 17
      %v801 = vpop.permute.xlu0 %800
      %802 = vrot.lane.b32.xlu0 %v557, 17
      %v803 = vpop.permute.xlu0 %802
      %804 = vrot.lane.b32.xlu0 %v560, 17
      %v805 = vpop.permute.xlu0 %804
      %806 = vrot.lane.b32.xlu0 %v562, 17
      %v807 = vpop.permute.xlu0 %806
      %808 = vrot.lane.b32.xlu0 %v565, 17
      %v809 = vpop.permute.xlu0 %808
      %810 = vrot.lane.b32.xlu0 %v567, 17
      %v811 = vpop.permute.xlu0 %810
      %812 = vrot.lane.b32.xlu0 %v570, 17
      %v813 = vpop.permute.xlu0 %812
      %814 = vrot.lane.b32.xlu0 %v572, 17
      %v815 = vpop.permute.xlu0 %814
      %816 = vrot.lane.b32.xlu0 %v575, 17
      %v817 = vpop.permute.xlu0 %816
      %818 = vrot.lane.b32.xlu0 %v577, 17
      %v819 = vpop.permute.xlu0 %818
      %820 = vrot.lane.b32.xlu0 %v580, 17
      %v821 = vpop.permute.xlu0 %820
      %822 = vrot.lane.b32.xlu0 %v582, 17
      %v823 = vpop.permute.xlu0 %822
      %v824 = vlaneseq
      %v825 = vand.u32 %v824, 127
      %vm826 = vcmp.lt.s32.totalorder %v825, 17
      %v827 = vsel %vm826, %v777, %v801
      %v828 = vsel %vm826, %v779, %v803
      %v829 = vsel %vm826, %v781, %v805
      %v830 = vsel %vm826, %v783, %v807
      %v831 = vsel %vm826, %v785, %v809
      %v832 = vsel %vm826, %v787, %v811
      %v833 = vsel %vm826, %v789, %v813
      %v834 = vsel %vm826, %v791, %v815
      %v835 = vsel %vm826, %v793, %v817
      %v836 = vsel %vm826, %v795, %v819
      %v837 = vsel %vm826, %v797, %v821
      %v838 = vsel %vm826, %v799, %v823
      %v839 = vsel %vm826, %v801, %v777
      %v840 = vsel %vm826, %v803, %v779
      %v841 = vsel %vm826, %v805, %v781
      %v842 = vsel %vm826, %v807, %v783
      %v843 = vsel %vm826, %v809, %v785
      %v844 = vsel %vm826, %v811, %v787
      %v845 = vsel %vm826, %v813, %v789
      %v846 = vsel %vm826, %v815, %v791
      %v847 = vsel %vm826, %v817, %v793
      %v848 = vsel %vm826, %v819, %v795
      %v849 = vsel %vm826, %v821, %v797
      %v850 = vsel %vm826, %v823, %v799
      %v851 = vld [vmem:[%s8] ss:$8 sm:$0x3]
      %v853 = vperm.slane %v851, 0
      %v854 = vperm.slane %v851, 1
      %v857 = vmul.f32 %v839, %v853
      %v858 = vmul.f32 %v827, %v854
      %v859 = vmul.f32 %v840, %v853
      %v860 = vmul.f32 %v828, %v854
      %v861 = vmul.f32 %v841, %v853
      %v862 = vmul.f32 %v829, %v854
      %v863 = vmul.f32 %v842, %v853
      %v864 = vmul.f32 %v830, %v854
      %v865 = vmul.f32 %v843, %v853
      %v866 = vmul.f32 %v831, %v854
      %v867 = vmul.f32 %v844, %v853
      %v868 = vmul.f32 %v832, %v854
      %v869 = vmul.f32 %v845, %v853
      %v870 = vmul.f32 %v833, %v854
      %v871 = vmul.f32 %v846, %v853
      %v872 = vmul.f32 %v834, %v854
      %v873 = vmul.f32 %v847, %v853
      %v874 = vmul.f32 %v835, %v854
      %v875 = vmul.f32 %v848, %v853
      %v876 = vmul.f32 %v836, %v854
      %v877 = vmul.f32 %v849, %v853
      %v878 = vmul.f32 %v837, %v854
      %v879 = vmul.f32 %v850, %v853
      %v880 = vmul.f32 %v838, %v854
      %881 = vset.pattern.permute.xlu0 0
      %882 = vperm.xlu0 %881, %v584
      %v883 = vpop.permute.xlu0 %882
      %885 = vset.pattern.permute.xlu0 0
      %886 = vperm.xlu0 %885, %v585
      %v887 = vpop.permute.xlu0 %886
      %889 = vset.pattern.permute.xlu0 0
      %890 = vperm.xlu0 %889, %v586
      %v891 = vpop.permute.xlu0 %890
      %893 = vset.pattern.permute.xlu0 0
      %894 = vperm.xlu0 %893, %v587
      %v895 = vpop.permute.xlu0 %894
      %897 = vset.pattern.permute.xlu0 0
      %898 = vperm.xlu0 %897, %v588
      %v899 = vpop.permute.xlu0 %898
      %901 = vset.pattern.permute.xlu0 0
      %902 = vperm.xlu0 %901, %v589
      %v903 = vpop.permute.xlu0 %902
      %905 = vset.pattern.permute.xlu0 0
      %906 = vperm.xlu0 %905, %v590
      %v907 = vpop.permute.xlu0 %906
      %909 = vset.pattern.permute.xlu0 0
      %910 = vperm.xlu0 %909, %v591
      %v911 = vpop.permute.xlu0 %910
      %913 = vset.pattern.permute.xlu0 0
      %914 = vperm.xlu0 %913, %v592
      %v915 = vpop.permute.xlu0 %914
      %917 = vset.pattern.permute.xlu0 0
      %918 = vperm.xlu0 %917, %v593
      %v919 = vpop.permute.xlu0 %918
      %921 = vset.pattern.permute.xlu0 0
      %922 = vperm.xlu0 %921, %v594
      %v923 = vpop.permute.xlu0 %922
      %925 = vset.pattern.permute.xlu0 0
      %926 = vperm.xlu0 %925, %v595
      %v927 = vpop.permute.xlu0 %926
      %v929 = vmul.f32 %v857, %v883
      %v930 = vmul.f32 %v858, %v883
      %v931 = vmul.f32 %v859, %v887
      %v932 = vmul.f32 %v860, %v887
      %v933 = vmul.f32 %v861, %v891
      %v934 = vmul.f32 %v862, %v891
      %v935 = vmul.f32 %v863, %v895
      %v936 = vmul.f32 %v864, %v895
      %v937 = vmul.f32 %v865, %v899
      %v938 = vmul.f32 %v866, %v899
      %v939 = vmul.f32 %v867, %v903
      %v940 = vmul.f32 %v868, %v903
      %v941 = vmul.f32 %v869, %v907
      %v942 = vmul.f32 %v870, %v907
      %v943 = vmul.f32 %v871, %v911
      %v944 = vmul.f32 %v872, %v911
      %v945 = vmul.f32 %v873, %v915
      %v946 = vmul.f32 %v874, %v915
      %v947 = vmul.f32 %v875, %v919
      %v948 = vmul.f32 %v876, %v919
      %v949 = vmul.f32 %v877, %v923
      %v950 = vmul.f32 %v878, %v923
      %v951 = vmul.f32 %v879, %v927
      %v952 = vmul.f32 %v880, %v927
      %v953 = vadd.f32 %v752, %v929
      %v954 = vadd.f32 %v753, %v930
      %v955 = vadd.f32 %v754, %v931
      %v956 = vadd.f32 %v755, %v932
      %v957 = vadd.f32 %v756, %v933
      %v958 = vadd.f32 %v757, %v934
      %v959 = vadd.f32 %v758, %v935
      %v960 = vadd.f32 %v759, %v936
      %v961 = vadd.f32 %v760, %v937
      %v962 = vadd.f32 %v761, %v938
      %v963 = vadd.f32 %v762, %v939
      %v964 = vadd.f32 %v763, %v940
      %v965 = vadd.f32 %v764, %v941
      %v966 = vadd.f32 %v765, %v942
      %v967 = vadd.f32 %v766, %v943
      %v968 = vadd.f32 %v767, %v944
      %v969 = vadd.f32 %v768, %v945
      %v970 = vadd.f32 %v769, %v946
      %v971 = vadd.f32 %v770, %v947
      %v972 = vadd.f32 %v771, %v948
      %v973 = vadd.f32 %v772, %v949
      %v974 = vadd.f32 %v773, %v950
      %v975 = vadd.f32 %v774, %v951
      %v976 = vadd.f32 %v775, %v952
      %977 = vrot.lane.b32.xlu0 %v516, 16
      %v978 = vpop.permute.xlu0 %977
      %979 = vrot.lane.b32.xlu0 %v518, 16
      %v980 = vpop.permute.xlu0 %979
      %981 = vrot.lane.b32.xlu0 %v521, 16
      %v982 = vpop.permute.xlu0 %981
      %983 = vrot.lane.b32.xlu0 %v523, 16
      %v984 = vpop.permute.xlu0 %983
      %985 = vrot.lane.b32.xlu0 %v526, 16
      %v986 = vpop.permute.xlu0 %985
      %987 = vrot.lane.b32.xlu0 %v528, 16
      %v988 = vpop.permute.xlu0 %987
      %989 = vrot.lane.b32.xlu0 %v531, 16
      %v990 = vpop.permute.xlu0 %989
      %991 = vrot.lane.b32.xlu0 %v533, 16
      %v992 = vpop.permute.xlu0 %991
      %993 = vrot.lane.b32.xlu0 %v536, 16
      %v994 = vpop.permute.xlu0 %993
      %995 = vrot.lane.b32.xlu0 %v538, 16
      %v996 = vpop.permute.xlu0 %995
      %997 = vrot.lane.b32.xlu0 %v541, 16
      %v998 = vpop.permute.xlu0 %997
      %999 = vrot.lane.b32.xlu0 %v543, 16
      %v1000 = vpop.permute.xlu0 %999
      %1001 = vrot.lane.b32.xlu0 %v555, 16
      %v1002 = vpop.permute.xlu0 %1001
      %1003 = vrot.lane.b32.xlu0 %v557, 16
      %v1004 = vpop.permute.xlu0 %1003
      %1005 = vrot.lane.b32.xlu0 %v560, 16
      %v1006 = vpop.permute.xlu0 %1005
      %1007 = vrot.lane.b32.xlu0 %v562, 16
      %v1008 = vpop.permute.xlu0 %1007
      %1009 = vrot.lane.b32.xlu0 %v565, 16
      %v1010 = vpop.permute.xlu0 %1009
      %1011 = vrot.lane.b32.xlu0 %v567, 16
      %v1012 = vpop.permute.xlu0 %1011
      %1013 = vrot.lane.b32.xlu0 %v570, 16
      %v1014 = vpop.permute.xlu0 %1013
      %1015 = vrot.lane.b32.xlu0 %v572, 16
      %v1016 = vpop.permute.xlu0 %1015
      %1017 = vrot.lane.b32.xlu0 %v575, 16
      %v1018 = vpop.permute.xlu0 %1017
      %1019 = vrot.lane.b32.xlu0 %v577, 16
      %v1020 = vpop.permute.xlu0 %1019
      %1021 = vrot.lane.b32.xlu0 %v580, 16
      %v1022 = vpop.permute.xlu0 %1021
      %1023 = vrot.lane.b32.xlu0 %v582, 16
      %v1024 = vpop.permute.xlu0 %1023
      %vm1025 = vcmp.lt.s32.totalorder %v825, 16
      %v1026 = vsel %vm1025, %v978, %v1002
      %v1027 = vsel %vm1025, %v980, %v1004
      %v1028 = vsel %vm1025, %v982, %v1006
      %v1029 = vsel %vm1025, %v984, %v1008
      %v1030 = vsel %vm1025, %v986, %v1010
      %v1031 = vsel %vm1025, %v988, %v1012
      %v1032 = vsel %vm1025, %v990, %v1014
      %v1033 = vsel %vm1025, %v992, %v1016
      %v1034 = vsel %vm1025, %v994, %v1018
      %v1035 = vsel %vm1025, %v996, %v1020
      %v1036 = vsel %vm1025, %v998, %v1022
      %v1037 = vsel %vm1025, %v1000, %v1024
      %v1038 = vsel %vm1025, %v1002, %v978
      %v1039 = vsel %vm1025, %v1004, %v980
      %v1040 = vsel %vm1025, %v1006, %v982
      %v1041 = vsel %vm1025, %v1008, %v984
      %v1042 = vsel %vm1025, %v1010, %v986
      %v1043 = vsel %vm1025, %v1012, %v988
      %v1044 = vsel %vm1025, %v1014, %v990
      %v1045 = vsel %vm1025, %v1016, %v992
      %v1046 = vsel %vm1025, %v1018, %v994
      %v1047 = vsel %vm1025, %v1020, %v996
      %v1048 = vsel %vm1025, %v1022, %v998
      %v1049 = vsel %vm1025, %v1024, %v1000
      %s1050 = scalar_lea.vmem %s8, 1
      %v1051 = vld [vmem:[%s1050] ss:$8 sm:$0x3]
      %v1053 = vperm.slane %v1051, 0
      %v1054 = vperm.slane %v1051, 1
      %v1057 = vmul.f32 %v1038, %v1053
      %v1058 = vmul.f32 %v1026, %v1054
      %v1059 = vmul.f32 %v1039, %v1053
      %v1060 = vmul.f32 %v1027, %v1054
      %v1061 = vmul.f32 %v1040, %v1053
      %v1062 = vmul.f32 %v1028, %v1054
      %v1063 = vmul.f32 %v1041, %v1053
      %v1064 = vmul.f32 %v1029, %v1054
      %v1065 = vmul.f32 %v1042, %v1053
      %v1066 = vmul.f32 %v1030, %v1054
      %v1067 = vmul.f32 %v1043, %v1053
      %v1068 = vmul.f32 %v1031, %v1054
      %v1069 = vmul.f32 %v1044, %v1053
      %v1070 = vmul.f32 %v1032, %v1054
      %v1071 = vmul.f32 %v1045, %v1053
      %v1072 = vmul.f32 %v1033, %v1054
      %v1073 = vmul.f32 %v1046, %v1053
      %v1074 = vmul.f32 %v1034, %v1054
      %v1075 = vmul.f32 %v1047, %v1053
      %v1076 = vmul.f32 %v1035, %v1054
      %v1077 = vmul.f32 %v1048, %v1053
      %v1078 = vmul.f32 %v1036, %v1054
      %v1079 = vmul.f32 %v1049, %v1053
      %v1080 = vmul.f32 %v1037, %v1054
      %1081 = vset.pattern.permute.xlu0 1
      %1082 = vperm.xlu0 %1081, %v584
      %v1083 = vpop.permute.xlu0 %1082
      %1085 = vset.pattern.permute.xlu0 1
      %1086 = vperm.xlu0 %1085, %v585
      %v1087 = vpop.permute.xlu0 %1086
      %1089 = vset.pattern.permute.xlu0 1
      %1090 = vperm.xlu0 %1089, %v586
      %v1091 = vpop.permute.xlu0 %1090
      %1093 = vset.pattern.permute.xlu0 1
      %1094 = vperm.xlu0 %1093, %v587
      %v1095 = vpop.permute.xlu0 %1094
      %1097 = vset.pattern.permute.xlu0 1
      %1098 = vperm.xlu0 %1097, %v588
      %v1099 = vpop.permute.xlu0 %1098
      %1101 = vset.pattern.permute.xlu0 1
      %1102 = vperm.xlu0 %1101, %v589
      %v1103 = vpop.permute.xlu0 %1102
      %1105 = vset.pattern.permute.xlu0 1
      %1106 = vperm.xlu0 %1105, %v590
      %v1107 = vpop.permute.xlu0 %1106
      %1109 = vset.pattern.permute.xlu0 1
      %1110 = vperm.xlu0 %1109, %v591
      %v1111 = vpop.permute.xlu0 %1110
      %1113 = vset.pattern.permute.xlu0 1
      %1114 = vperm.xlu0 %1113, %v592
      %v1115 = vpop.permute.xlu0 %1114
      %1117 = vset.pattern.permute.xlu0 1
      %1118 = vperm.xlu0 %1117, %v593
      %v1119 = vpop.permute.xlu0 %1118
      %1121 = vset.pattern.permute.xlu0 1
      %1122 = vperm.xlu0 %1121, %v594
      %v1123 = vpop.permute.xlu0 %1122
      %1125 = vset.pattern.permute.xlu0 1
      %1126 = vperm.xlu0 %1125, %v595
      %v1127 = vpop.permute.xlu0 %1126
      %v1129 = vmul.f32 %v1057, %v1083
      %v1130 = vmul.f32 %v1058, %v1083
      %v1131 = vmul.f32 %v1059, %v1087
      %v1132 = vmul.f32 %v1060, %v1087
      %v1133 = vmul.f32 %v1061, %v1091
      %v1134 = vmul.f32 %v1062, %v1091
      %v1135 = vmul.f32 %v1063, %v1095
      %v1136 = vmul.f32 %v1064, %v1095
      %v1137 = vmul.f32 %v1065, %v1099
      %v1138 = vmul.f32 %v1066, %v1099
      %v1139 = vmul.f32 %v1067, %v1103
      %v1140 = vmul.f32 %v1068, %v1103
      %v1141 = vmul.f32 %v1069, %v1107
      %v1142 = vmul.f32 %v1070, %v1107
      %v1143 = vmul.f32 %v1071, %v1111
      %v1144 = vmul.f32 %v1072, %v1111
      %v1145 = vmul.f32 %v1073, %v1115
      %v1146 = vmul.f32 %v1074, %v1115
      %v1147 = vmul.f32 %v1075, %v1119
      %v1148 = vmul.f32 %v1076, %v1119
      %v1149 = vmul.f32 %v1077, %v1123
      %v1150 = vmul.f32 %v1078, %v1123
      %v1151 = vmul.f32 %v1079, %v1127
      %v1152 = vmul.f32 %v1080, %v1127
      %v1153 = vadd.f32 %v953, %v1129
      %v1154 = vadd.f32 %v954, %v1130
      %v1155 = vadd.f32 %v955, %v1131
      %v1156 = vadd.f32 %v956, %v1132
      %v1157 = vadd.f32 %v957, %v1133
      %v1158 = vadd.f32 %v958, %v1134
      %v1159 = vadd.f32 %v959, %v1135
      %v1160 = vadd.f32 %v960, %v1136
      %v1161 = vadd.f32 %v961, %v1137
      %v1162 = vadd.f32 %v962, %v1138
      %v1163 = vadd.f32 %v963, %v1139
      %v1164 = vadd.f32 %v964, %v1140
      %v1165 = vadd.f32 %v965, %v1141
      %v1166 = vadd.f32 %v966, %v1142
      %v1167 = vadd.f32 %v967, %v1143
      %v1168 = vadd.f32 %v968, %v1144
      %v1169 = vadd.f32 %v969, %v1145
      %v1170 = vadd.f32 %v970, %v1146
      %v1171 = vadd.f32 %v971, %v1147
      %v1172 = vadd.f32 %v972, %v1148
      %v1173 = vadd.f32 %v973, %v1149
      %v1174 = vadd.f32 %v974, %v1150
      %v1175 = vadd.f32 %v975, %v1151
      %v1176 = vadd.f32 %v976, %v1152
      %1177 = vrot.lane.b32.xlu0 %v516, 15
      %v1178 = vpop.permute.xlu0 %1177
      %1179 = vrot.lane.b32.xlu0 %v518, 15
      %v1180 = vpop.permute.xlu0 %1179
      %1181 = vrot.lane.b32.xlu0 %v521, 15
      %v1182 = vpop.permute.xlu0 %1181
      %1183 = vrot.lane.b32.xlu0 %v523, 15
      %v1184 = vpop.permute.xlu0 %1183
      %1185 = vrot.lane.b32.xlu0 %v526, 15
      %v1186 = vpop.permute.xlu0 %1185
      %1187 = vrot.lane.b32.xlu0 %v528, 15
      %v1188 = vpop.permute.xlu0 %1187
      %1189 = vrot.lane.b32.xlu0 %v531, 15
      %v1190 = vpop.permute.xlu0 %1189
      %1191 = vrot.lane.b32.xlu0 %v533, 15
      %v1192 = vpop.permute.xlu0 %1191
      %1193 = vrot.lane.b32.xlu0 %v536, 15
      %v1194 = vpop.permute.xlu0 %1193
      %1195 = vrot.lane.b32.xlu0 %v538, 15
      %v1196 = vpop.permute.xlu0 %1195
      %1197 = vrot.lane.b32.xlu0 %v541, 15
      %v1198 = vpop.permute.xlu0 %1197
      %1199 = vrot.lane.b32.xlu0 %v543, 15
      %v1200 = vpop.permute.xlu0 %1199
      %1201 = vrot.lane.b32.xlu0 %v555, 15
      %v1202 = vpop.permute.xlu0 %1201
      %1203 = vrot.lane.b32.xlu0 %v557, 15
      %v1204 = vpop.permute.xlu0 %1203
      %1205 = vrot.lane.b32.xlu0 %v560, 15
      %v1206 = vpop.permute.xlu0 %1205
      %1207 = vrot.lane.b32.xlu0 %v562, 15
      %v1208 = vpop.permute.xlu0 %1207
      %1209 = vrot.lane.b32.xlu0 %v565, 15
      %v1210 = vpop.permute.xlu0 %1209
      %1211 = vrot.lane.b32.xlu0 %v567, 15
      %v1212 = vpop.permute.xlu0 %1211
      %1213 = vrot.lane.b32.xlu0 %v570, 15
      %v1214 = vpop.permute.xlu0 %1213
      %1215 = vrot.lane.b32.xlu0 %v572, 15
      %v1216 = vpop.permute.xlu0 %1215
      %1217 = vrot.lane.b32.xlu0 %v575, 15
      %v1218 = vpop.permute.xlu0 %1217
      %1219 = vrot.lane.b32.xlu0 %v577, 15
      %v1220 = vpop.permute.xlu0 %1219
      %1221 = vrot.lane.b32.xlu0 %v580, 15
      %v1222 = vpop.permute.xlu0 %1221
      %1223 = vrot.lane.b32.xlu0 %v582, 15
      %v1224 = vpop.permute.xlu0 %1223
      %vm1225 = vcmp.lt.s32.totalorder %v825, 15
      %v1226 = vsel %vm1225, %v1178, %v1202
      %v1227 = vsel %vm1225, %v1180, %v1204
      %v1228 = vsel %vm1225, %v1182, %v1206
      %v1229 = vsel %vm1225, %v1184, %v1208
      %v1230 = vsel %vm1225, %v1186, %v1210
      %v1231 = vsel %vm1225, %v1188, %v1212
      %v1232 = vsel %vm1225, %v1190, %v1214
      %v1233 = vsel %vm1225, %v1192, %v1216
      %v1234 = vsel %vm1225, %v1194, %v1218
      %v1235 = vsel %vm1225, %v1196, %v1220
      %v1236 = vsel %vm1225, %v1198, %v1222
      %v1237 = vsel %vm1225, %v1200, %v1224
      %v1238 = vsel %vm1225, %v1202, %v1178
      %v1239 = vsel %vm1225, %v1204, %v1180
      %v1240 = vsel %vm1225, %v1206, %v1182
      %v1241 = vsel %vm1225, %v1208, %v1184
      %v1242 = vsel %vm1225, %v1210, %v1186
      %v1243 = vsel %vm1225, %v1212, %v1188
      %v1244 = vsel %vm1225, %v1214, %v1190
      %v1245 = vsel %vm1225, %v1216, %v1192
      %v1246 = vsel %vm1225, %v1218, %v1194
      %v1247 = vsel %vm1225, %v1220, %v1196
      %v1248 = vsel %vm1225, %v1222, %v1198
      %v1249 = vsel %vm1225, %v1224, %v1200
      %s1250 = scalar_lea.vmem %s8, 2
      %v1251 = vld [vmem:[%s1250] ss:$8 sm:$0x3]
      %v1253 = vperm.slane %v1251, 0
      %v1254 = vperm.slane %v1251, 1
      %v1257 = vmul.f32 %v1238, %v1253
      %v1258 = vmul.f32 %v1226, %v1254
      %v1259 = vmul.f32 %v1239, %v1253
      %v1260 = vmul.f32 %v1227, %v1254
      %v1261 = vmul.f32 %v1240, %v1253
      %v1262 = vmul.f32 %v1228, %v1254
      %v1263 = vmul.f32 %v1241, %v1253
      %v1264 = vmul.f32 %v1229, %v1254
      %v1265 = vmul.f32 %v1242, %v1253
      %v1266 = vmul.f32 %v1230, %v1254
      %v1267 = vmul.f32 %v1243, %v1253
      %v1268 = vmul.f32 %v1231, %v1254
      %v1269 = vmul.f32 %v1244, %v1253
      %v1270 = vmul.f32 %v1232, %v1254
      %v1271 = vmul.f32 %v1245, %v1253
      %v1272 = vmul.f32 %v1233, %v1254
      %v1273 = vmul.f32 %v1246, %v1253
      %v1274 = vmul.f32 %v1234, %v1254
      %v1275 = vmul.f32 %v1247, %v1253
      %v1276 = vmul.f32 %v1235, %v1254
      %v1277 = vmul.f32 %v1248, %v1253
      %v1278 = vmul.f32 %v1236, %v1254
      %v1279 = vmul.f32 %v1249, %v1253
      %v1280 = vmul.f32 %v1237, %v1254
      %1281 = vset.pattern.permute.xlu0 2
      %1282 = vperm.xlu0 %1281, %v584
      %v1283 = vpop.permute.xlu0 %1282
      %1285 = vset.pattern.permute.xlu0 2
      %1286 = vperm.xlu0 %1285, %v585
      %v1287 = vpop.permute.xlu0 %1286
      %1289 = vset.pattern.permute.xlu0 2
      %1290 = vperm.xlu0 %1289, %v586
      %v1291 = vpop.permute.xlu0 %1290
      %1293 = vset.pattern.permute.xlu0 2
      %1294 = vperm.xlu0 %1293, %v587
      %v1295 = vpop.permute.xlu0 %1294
      %1297 = vset.pattern.permute.xlu0 2
      %1298 = vperm.xlu0 %1297, %v588
      %v1299 = vpop.permute.xlu0 %1298
      %1301 = vset.pattern.permute.xlu0 2
      %1302 = vperm.xlu0 %1301, %v589
      %v1303 = vpop.permute.xlu0 %1302
      %1305 = vset.pattern.permute.xlu0 2
      %1306 = vperm.xlu0 %1305, %v590
      %v1307 = vpop.permute.xlu0 %1306
      %1309 = vset.pattern.permute.xlu0 2
      %1310 = vperm.xlu0 %1309, %v591
      %v1311 = vpop.permute.xlu0 %1310
      %1313 = vset.pattern.permute.xlu0 2
      %1314 = vperm.xlu0 %1313, %v592
      %v1315 = vpop.permute.xlu0 %1314
      %1317 = vset.pattern.permute.xlu0 2
      %1318 = vperm.xlu0 %1317, %v593
      %v1319 = vpop.permute.xlu0 %1318
      %1321 = vset.pattern.permute.xlu0 2
      %1322 = vperm.xlu0 %1321, %v594
      %v1323 = vpop.permute.xlu0 %1322
      %1325 = vset.pattern.permute.xlu0 2
      %1326 = vperm.xlu0 %1325, %v595
      %v1327 = vpop.permute.xlu0 %1326
      %v1329 = vmul.f32 %v1257, %v1283
      %v1330 = vmul.f32 %v1258, %v1283
      %v1331 = vmul.f32 %v1259, %v1287
      %v1332 = vmul.f32 %v1260, %v1287
      %v1333 = vmul.f32 %v1261, %v1291
      %v1334 = vmul.f32 %v1262, %v1291
      %v1335 = vmul.f32 %v1263, %v1295
      %v1336 = vmul.f32 %v1264, %v1295
      %v1337 = vmul.f32 %v1265, %v1299
      %v1338 = vmul.f32 %v1266, %v1299
      %v1339 = vmul.f32 %v1267, %v1303
      %v1340 = vmul.f32 %v1268, %v1303
      %v1341 = vmul.f32 %v1269, %v1307
      %v1342 = vmul.f32 %v1270, %v1307
      %v1343 = vmul.f32 %v1271, %v1311
      %v1344 = vmul.f32 %v1272, %v1311
      %v1345 = vmul.f32 %v1273, %v1315
      %v1346 = vmul.f32 %v1274, %v1315
      %v1347 = vmul.f32 %v1275, %v1319
      %v1348 = vmul.f32 %v1276, %v1319
      %v1349 = vmul.f32 %v1277, %v1323
      %v1350 = vmul.f32 %v1278, %v1323
      %v1351 = vmul.f32 %v1279, %v1327
      %v1352 = vmul.f32 %v1280, %v1327
      %v1353 = vadd.f32 %v1153, %v1329
      %v1354 = vadd.f32 %v1154, %v1330
      %v1355 = vadd.f32 %v1155, %v1331
      %v1356 = vadd.f32 %v1156, %v1332
      %v1357 = vadd.f32 %v1157, %v1333
      %v1358 = vadd.f32 %v1158, %v1334
      %v1359 = vadd.f32 %v1159, %v1335
      %v1360 = vadd.f32 %v1160, %v1336
      %v1361 = vadd.f32 %v1161, %v1337
      %v1362 = vadd.f32 %v1162, %v1338
      %v1363 = vadd.f32 %v1163, %v1339
      %v1364 = vadd.f32 %v1164, %v1340
      %v1365 = vadd.f32 %v1165, %v1341
      %v1366 = vadd.f32 %v1166, %v1342
      %v1367 = vadd.f32 %v1167, %v1343
      %v1368 = vadd.f32 %v1168, %v1344
      %v1369 = vadd.f32 %v1169, %v1345
      %v1370 = vadd.f32 %v1170, %v1346
      %v1371 = vadd.f32 %v1171, %v1347
      %v1372 = vadd.f32 %v1172, %v1348
      %v1373 = vadd.f32 %v1173, %v1349
      %v1374 = vadd.f32 %v1174, %v1350
      %v1375 = vadd.f32 %v1175, %v1351
      %v1376 = vadd.f32 %v1176, %v1352
      %1377 = vrot.lane.b32.xlu0 %v516, 1
      %v1378 = vpop.permute.xlu0 %1377
      %1379 = vrot.lane.b32.xlu0 %v518, 1
      %v1380 = vpop.permute.xlu0 %1379
      %1381 = vrot.lane.b32.xlu0 %v521, 1
      %v1382 = vpop.permute.xlu0 %1381
      %1383 = vrot.lane.b32.xlu0 %v523, 1
      %v1384 = vpop.permute.xlu0 %1383
      %1385 = vrot.lane.b32.xlu0 %v526, 1
      %v1386 = vpop.permute.xlu0 %1385
      %1387 = vrot.lane.b32.xlu0 %v528, 1
      %v1388 = vpop.permute.xlu0 %1387
      %1389 = vrot.lane.b32.xlu0 %v531, 1
      %v1390 = vpop.permute.xlu0 %1389
      %1391 = vrot.lane.b32.xlu0 %v533, 1
      %v1392 = vpop.permute.xlu0 %1391
      %1393 = vrot.lane.b32.xlu0 %v536, 1
      %v1394 = vpop.permute.xlu0 %1393
      %1395 = vrot.lane.b32.xlu0 %v538, 1
      %v1396 = vpop.permute.xlu0 %1395
      %1397 = vrot.lane.b32.xlu0 %v541, 1
      %v1398 = vpop.permute.xlu0 %1397
      %1399 = vrot.lane.b32.xlu0 %v543, 1
      %v1400 = vpop.permute.xlu0 %1399
      %1401 = vrot.lane.b32.xlu0 %v555, 1
      %v1402 = vpop.permute.xlu0 %1401
      %1403 = vrot.lane.b32.xlu0 %v557, 1
      %v1404 = vpop.permute.xlu0 %1403
      %1405 = vrot.lane.b32.xlu0 %v560, 1
      %v1406 = vpop.permute.xlu0 %1405
      %1407 = vrot.lane.b32.xlu0 %v562, 1
      %v1408 = vpop.permute.xlu0 %1407
      %1409 = vrot.lane.b32.xlu0 %v565, 1
      %v1410 = vpop.permute.xlu0 %1409
      %1411 = vrot.lane.b32.xlu0 %v567, 1
      %v1412 = vpop.permute.xlu0 %1411
      %1413 = vrot.lane.b32.xlu0 %v570, 1
      %v1414 = vpop.permute.xlu0 %1413
      %1415 = vrot.lane.b32.xlu0 %v572, 1
      %v1416 = vpop.permute.xlu0 %1415
      %1417 = vrot.lane.b32.xlu0 %v575, 1
      %v1418 = vpop.permute.xlu0 %1417
      %1419 = vrot.lane.b32.xlu0 %v577, 1
      %v1420 = vpop.permute.xlu0 %1419
      %1421 = vrot.lane.b32.xlu0 %v580, 1
      %v1422 = vpop.permute.xlu0 %1421
      %1423 = vrot.lane.b32.xlu0 %v582, 1
      %v1424 = vpop.permute.xlu0 %1423
      %vm1425 = vcmp.lt.s32.totalorder %v825, 1
      %v1426 = vsel %vm1425, %v1378, %v1402
      %v1427 = vsel %vm1425, %v1380, %v1404
      %v1428 = vsel %vm1425, %v1382, %v1406
      %v1429 = vsel %vm1425, %v1384, %v1408
      %v1430 = vsel %vm1425, %v1386, %v1410
      %v1431 = vsel %vm1425, %v1388, %v1412
      %v1432 = vsel %vm1425, %v1390, %v1414
      %v1433 = vsel %vm1425, %v1392, %v1416
      %v1434 = vsel %vm1425, %v1394, %v1418
      %v1435 = vsel %vm1425, %v1396, %v1420
      %v1436 = vsel %vm1425, %v1398, %v1422
      %v1437 = vsel %vm1425, %v1400, %v1424
      %v1438 = vsel %vm1425, %v1402, %v1378
      %v1439 = vsel %vm1425, %v1404, %v1380
      %v1440 = vsel %vm1425, %v1406, %v1382
      %v1441 = vsel %vm1425, %v1408, %v1384
      %v1442 = vsel %vm1425, %v1410, %v1386
      %v1443 = vsel %vm1425, %v1412, %v1388
      %v1444 = vsel %vm1425, %v1414, %v1390
      %v1445 = vsel %vm1425, %v1416, %v1392
      %v1446 = vsel %vm1425, %v1418, %v1394
      %v1447 = vsel %vm1425, %v1420, %v1396
      %v1448 = vsel %vm1425, %v1422, %v1398
      %v1449 = vsel %vm1425, %v1424, %v1400
      %s1450 = scalar_lea.vmem %s8, 3
      %v1451 = vld [vmem:[%s1450] ss:$8 sm:$0x3]
      %v1453 = vperm.slane %v1451, 0
      %v1454 = vperm.slane %v1451, 1
      %v1457 = vmul.f32 %v1438, %v1453
      %v1458 = vmul.f32 %v1426, %v1454
      %v1459 = vmul.f32 %v1439, %v1453
      %v1460 = vmul.f32 %v1427, %v1454
      %v1461 = vmul.f32 %v1440, %v1453
      %v1462 = vmul.f32 %v1428, %v1454
      %v1463 = vmul.f32 %v1441, %v1453
      %v1464 = vmul.f32 %v1429, %v1454
      %v1465 = vmul.f32 %v1442, %v1453
      %v1466 = vmul.f32 %v1430, %v1454
      %v1467 = vmul.f32 %v1443, %v1453
      %v1468 = vmul.f32 %v1431, %v1454
      %v1469 = vmul.f32 %v1444, %v1453
      %v1470 = vmul.f32 %v1432, %v1454
      %v1471 = vmul.f32 %v1445, %v1453
      %v1472 = vmul.f32 %v1433, %v1454
      %v1473 = vmul.f32 %v1446, %v1453
      %v1474 = vmul.f32 %v1434, %v1454
      %v1475 = vmul.f32 %v1447, %v1453
      %v1476 = vmul.f32 %v1435, %v1454
      %v1477 = vmul.f32 %v1448, %v1453
      %v1478 = vmul.f32 %v1436, %v1454
      %v1479 = vmul.f32 %v1449, %v1453
      %v1480 = vmul.f32 %v1437, %v1454
      %1481 = vset.pattern.permute.xlu0 3
      %1482 = vperm.xlu0 %1481, %v584
      %v1483 = vpop.permute.xlu0 %1482
      %1485 = vset.pattern.permute.xlu0 3
      %1486 = vperm.xlu0 %1485, %v585
      %v1487 = vpop.permute.xlu0 %1486
      %1489 = vset.pattern.permute.xlu0 3
      %1490 = vperm.xlu0 %1489, %v586
      %v1491 = vpop.permute.xlu0 %1490
      %1493 = vset.pattern.permute.xlu0 3
      %1494 = vperm.xlu0 %1493, %v587
      %v1495 = vpop.permute.xlu0 %1494
      %1497 = vset.pattern.permute.xlu0 3
      %1498 = vperm.xlu0 %1497, %v588
      %v1499 = vpop.permute.xlu0 %1498
      %1501 = vset.pattern.permute.xlu0 3
      %1502 = vperm.xlu0 %1501, %v589
      %v1503 = vpop.permute.xlu0 %1502
      %1505 = vset.pattern.permute.xlu0 3
      %1506 = vperm.xlu0 %1505, %v590
      %v1507 = vpop.permute.xlu0 %1506
      %1509 = vset.pattern.permute.xlu0 3
      %1510 = vperm.xlu0 %1509, %v591
      %v1511 = vpop.permute.xlu0 %1510
      %1513 = vset.pattern.permute.xlu0 3
      %1514 = vperm.xlu0 %1513, %v592
      %v1515 = vpop.permute.xlu0 %1514
      %1517 = vset.pattern.permute.xlu0 3
      %1518 = vperm.xlu0 %1517, %v593
      %v1519 = vpop.permute.xlu0 %1518
      %1521 = vset.pattern.permute.xlu0 3
      %1522 = vperm.xlu0 %1521, %v594
      %v1523 = vpop.permute.xlu0 %1522
      %1525 = vset.pattern.permute.xlu0 3
      %1526 = vperm.xlu0 %1525, %v595
      %v1527 = vpop.permute.xlu0 %1526
      %v1529 = vmul.f32 %v1457, %v1483
      %v1530 = vmul.f32 %v1458, %v1483
      %v1531 = vmul.f32 %v1459, %v1487
      %v1532 = vmul.f32 %v1460, %v1487
      %v1533 = vmul.f32 %v1461, %v1491
      %v1534 = vmul.f32 %v1462, %v1491
      %v1535 = vmul.f32 %v1463, %v1495
      %v1536 = vmul.f32 %v1464, %v1495
      %v1537 = vmul.f32 %v1465, %v1499
      %v1538 = vmul.f32 %v1466, %v1499
      %v1539 = vmul.f32 %v1467, %v1503
      %v1540 = vmul.f32 %v1468, %v1503
      %v1541 = vmul.f32 %v1469, %v1507
      %v1542 = vmul.f32 %v1470, %v1507
      %v1543 = vmul.f32 %v1471, %v1511
      %v1544 = vmul.f32 %v1472, %v1511
      %v1545 = vmul.f32 %v1473, %v1515
      %v1546 = vmul.f32 %v1474, %v1515
      %v1547 = vmul.f32 %v1475, %v1519
      %v1548 = vmul.f32 %v1476, %v1519
      %v1549 = vmul.f32 %v1477, %v1523
      %v1550 = vmul.f32 %v1478, %v1523
      %v1551 = vmul.f32 %v1479, %v1527
      %v1552 = vmul.f32 %v1480, %v1527
      %v1553 = vadd.f32 %v1353, %v1529
      %v1554 = vadd.f32 %v1354, %v1530
      %v1555 = vadd.f32 %v1355, %v1531
      %v1556 = vadd.f32 %v1356, %v1532
      %v1557 = vadd.f32 %v1357, %v1533
      %v1558 = vadd.f32 %v1358, %v1534
      %v1559 = vadd.f32 %v1359, %v1535
      %v1560 = vadd.f32 %v1360, %v1536
      %v1561 = vadd.f32 %v1361, %v1537
      %v1562 = vadd.f32 %v1362, %v1538
      %v1563 = vadd.f32 %v1363, %v1539
      %v1564 = vadd.f32 %v1364, %v1540
      %v1565 = vadd.f32 %v1365, %v1541
      %v1566 = vadd.f32 %v1366, %v1542
      %v1567 = vadd.f32 %v1367, %v1543
      %v1568 = vadd.f32 %v1368, %v1544
      %v1569 = vadd.f32 %v1369, %v1545
      %v1570 = vadd.f32 %v1370, %v1546
      %v1571 = vadd.f32 %v1371, %v1547
      %v1572 = vadd.f32 %v1372, %v1548
      %v1573 = vadd.f32 %v1373, %v1549
      %v1574 = vadd.f32 %v1374, %v1550
      %v1575 = vadd.f32 %v1375, %v1551
      %v1576 = vadd.f32 %v1376, %v1552
      %1577 = vrot.lane.b32.xlu0 %v516, 127
      %v1578 = vpop.permute.xlu0 %1577
      %1579 = vrot.lane.b32.xlu0 %v518, 127
      %v1580 = vpop.permute.xlu0 %1579
      %1581 = vrot.lane.b32.xlu0 %v521, 127
      %v1582 = vpop.permute.xlu0 %1581
      %1583 = vrot.lane.b32.xlu0 %v523, 127
      %v1584 = vpop.permute.xlu0 %1583
      %1585 = vrot.lane.b32.xlu0 %v526, 127
      %v1586 = vpop.permute.xlu0 %1585
      %1587 = vrot.lane.b32.xlu0 %v528, 127
      %v1588 = vpop.permute.xlu0 %1587
      %1589 = vrot.lane.b32.xlu0 %v531, 127
      %v1590 = vpop.permute.xlu0 %1589
      %1591 = vrot.lane.b32.xlu0 %v533, 127
      %v1592 = vpop.permute.xlu0 %1591
      %1593 = vrot.lane.b32.xlu0 %v536, 127
      %v1594 = vpop.permute.xlu0 %1593
      %1595 = vrot.lane.b32.xlu0 %v538, 127
      %v1596 = vpop.permute.xlu0 %1595
      %1597 = vrot.lane.b32.xlu0 %v541, 127
      %v1598 = vpop.permute.xlu0 %1597
      %1599 = vrot.lane.b32.xlu0 %v543, 127
      %v1600 = vpop.permute.xlu0 %1599
      %1601 = vrot.lane.b32.xlu0 %v555, 127
      %v1602 = vpop.permute.xlu0 %1601
      %1603 = vrot.lane.b32.xlu0 %v557, 127
      %v1604 = vpop.permute.xlu0 %1603
      %1605 = vrot.lane.b32.xlu0 %v560, 127
      %v1606 = vpop.permute.xlu0 %1605
      %1607 = vrot.lane.b32.xlu0 %v562, 127
      %v1608 = vpop.permute.xlu0 %1607
      %1609 = vrot.lane.b32.xlu0 %v565, 127
      %v1610 = vpop.permute.xlu0 %1609
      %1611 = vrot.lane.b32.xlu0 %v567, 127
      %v1612 = vpop.permute.xlu0 %1611
      %1613 = vrot.lane.b32.xlu0 %v570, 127
      %v1614 = vpop.permute.xlu0 %1613
      %1615 = vrot.lane.b32.xlu0 %v572, 127
      %v1616 = vpop.permute.xlu0 %1615
      %1617 = vrot.lane.b32.xlu0 %v575, 127
      %v1618 = vpop.permute.xlu0 %1617
      %1619 = vrot.lane.b32.xlu0 %v577, 127
      %v1620 = vpop.permute.xlu0 %1619
      %1621 = vrot.lane.b32.xlu0 %v580, 127
      %v1622 = vpop.permute.xlu0 %1621
      %1623 = vrot.lane.b32.xlu0 %v582, 127
      %v1624 = vpop.permute.xlu0 %1623
      %vm1625 = vcmp.lt.s32.totalorder %v825, 127
      %v1626 = vsel %vm1625, %v1578, %v1602
      %v1627 = vsel %vm1625, %v1580, %v1604
      %v1628 = vsel %vm1625, %v1582, %v1606
      %v1629 = vsel %vm1625, %v1584, %v1608
      %v1630 = vsel %vm1625, %v1586, %v1610
      %v1631 = vsel %vm1625, %v1588, %v1612
      %v1632 = vsel %vm1625, %v1590, %v1614
      %v1633 = vsel %vm1625, %v1592, %v1616
      %v1634 = vsel %vm1625, %v1594, %v1618
      %v1635 = vsel %vm1625, %v1596, %v1620
      %v1636 = vsel %vm1625, %v1598, %v1622
      %v1637 = vsel %vm1625, %v1600, %v1624
      %v1638 = vsel %vm1625, %v1602, %v1578
      %v1639 = vsel %vm1625, %v1604, %v1580
      %v1640 = vsel %vm1625, %v1606, %v1582
      %v1641 = vsel %vm1625, %v1608, %v1584
      %v1642 = vsel %vm1625, %v1610, %v1586
      %v1643 = vsel %vm1625, %v1612, %v1588
      %v1644 = vsel %vm1625, %v1614, %v1590
      %v1645 = vsel %vm1625, %v1616, %v1592
      %v1646 = vsel %vm1625, %v1618, %v1594
      %v1647 = vsel %vm1625, %v1620, %v1596
      %v1648 = vsel %vm1625, %v1622, %v1598
      %v1649 = vsel %vm1625, %v1624, %v1600
      %s1650 = scalar_lea.vmem %s8, 5
      %v1651 = vld [vmem:[%s1650] ss:$8 sm:$0x3]
      %v1653 = vperm.slane %v1651, 0
      %v1654 = vperm.slane %v1651, 1
      %v1657 = vmul.f32 %v1626, %v1653
      %v1658 = vmul.f32 %v1638, %v1654
      %v1659 = vmul.f32 %v1627, %v1653
      %v1660 = vmul.f32 %v1639, %v1654
      %v1661 = vmul.f32 %v1628, %v1653
      %v1662 = vmul.f32 %v1640, %v1654
      %v1663 = vmul.f32 %v1629, %v1653
      %v1664 = vmul.f32 %v1641, %v1654
      %v1665 = vmul.f32 %v1630, %v1653
      %v1666 = vmul.f32 %v1642, %v1654
      %v1667 = vmul.f32 %v1631, %v1653
      %v1668 = vmul.f32 %v1643, %v1654
      %v1669 = vmul.f32 %v1632, %v1653
      %v1670 = vmul.f32 %v1644, %v1654
      %v1671 = vmul.f32 %v1633, %v1653
      %v1672 = vmul.f32 %v1645, %v1654
      %v1673 = vmul.f32 %v1634, %v1653
      %v1674 = vmul.f32 %v1646, %v1654
      %v1675 = vmul.f32 %v1635, %v1653
      %v1676 = vmul.f32 %v1647, %v1654
      %v1677 = vmul.f32 %v1636, %v1653
      %v1678 = vmul.f32 %v1648, %v1654
      %v1679 = vmul.f32 %v1637, %v1653
      %v1680 = vmul.f32 %v1649, %v1654
      %1681 = vset.pattern.permute.xlu0 5
      %1682 = vperm.xlu0 %1681, %v584
      %v1683 = vpop.permute.xlu0 %1682
      %1685 = vset.pattern.permute.xlu0 5
      %1686 = vperm.xlu0 %1685, %v585
      %v1687 = vpop.permute.xlu0 %1686
      %1689 = vset.pattern.permute.xlu0 5
      %1690 = vperm.xlu0 %1689, %v586
      %v1691 = vpop.permute.xlu0 %1690
      %1693 = vset.pattern.permute.xlu0 5
      %1694 = vperm.xlu0 %1693, %v587
      %v1695 = vpop.permute.xlu0 %1694
      %1697 = vset.pattern.permute.xlu0 5
      %1698 = vperm.xlu0 %1697, %v588
      %v1699 = vpop.permute.xlu0 %1698
      %1701 = vset.pattern.permute.xlu0 5
      %1702 = vperm.xlu0 %1701, %v589
      %v1703 = vpop.permute.xlu0 %1702
      %1705 = vset.pattern.permute.xlu0 5
      %1706 = vperm.xlu0 %1705, %v590
      %v1707 = vpop.permute.xlu0 %1706
      %1709 = vset.pattern.permute.xlu0 5
      %1710 = vperm.xlu0 %1709, %v591
      %v1711 = vpop.permute.xlu0 %1710
      %1713 = vset.pattern.permute.xlu0 5
      %1714 = vperm.xlu0 %1713, %v592
      %v1715 = vpop.permute.xlu0 %1714
      %1717 = vset.pattern.permute.xlu0 5
      %1718 = vperm.xlu0 %1717, %v593
      %v1719 = vpop.permute.xlu0 %1718
      %1721 = vset.pattern.permute.xlu0 5
      %1722 = vperm.xlu0 %1721, %v594
      %v1723 = vpop.permute.xlu0 %1722
      %1725 = vset.pattern.permute.xlu0 5
      %1726 = vperm.xlu0 %1725, %v595
      %v1727 = vpop.permute.xlu0 %1726
      %v1729 = vmul.f32 %v1657, %v1683
      %v1730 = vmul.f32 %v1658, %v1683
      %v1731 = vmul.f32 %v1659, %v1687
      %v1732 = vmul.f32 %v1660, %v1687
      %v1733 = vmul.f32 %v1661, %v1691
      %v1734 = vmul.f32 %v1662, %v1691
      %v1735 = vmul.f32 %v1663, %v1695
      %v1736 = vmul.f32 %v1664, %v1695
      %v1737 = vmul.f32 %v1665, %v1699
      %v1738 = vmul.f32 %v1666, %v1699
      %v1739 = vmul.f32 %v1667, %v1703
      %v1740 = vmul.f32 %v1668, %v1703
      %v1741 = vmul.f32 %v1669, %v1707
      %v1742 = vmul.f32 %v1670, %v1707
      %v1743 = vmul.f32 %v1671, %v1711
      %v1744 = vmul.f32 %v1672, %v1711
      %v1745 = vmul.f32 %v1673, %v1715
      %v1746 = vmul.f32 %v1674, %v1715
      %v1747 = vmul.f32 %v1675, %v1719
      %v1748 = vmul.f32 %v1676, %v1719
      %v1749 = vmul.f32 %v1677, %v1723
      %v1750 = vmul.f32 %v1678, %v1723
      %v1751 = vmul.f32 %v1679, %v1727
      %v1752 = vmul.f32 %v1680, %v1727
      %v1753 = vadd.f32 %v1553, %v1729
      %v1754 = vadd.f32 %v1554, %v1730
      %v1755 = vadd.f32 %v1555, %v1731
      %v1756 = vadd.f32 %v1556, %v1732
      %v1757 = vadd.f32 %v1557, %v1733
      %v1758 = vadd.f32 %v1558, %v1734
      %v1759 = vadd.f32 %v1559, %v1735
      %v1760 = vadd.f32 %v1560, %v1736
      %v1761 = vadd.f32 %v1561, %v1737
      %v1762 = vadd.f32 %v1562, %v1738
      %v1763 = vadd.f32 %v1563, %v1739
      %v1764 = vadd.f32 %v1564, %v1740
      %v1765 = vadd.f32 %v1565, %v1741
      %v1766 = vadd.f32 %v1566, %v1742
      %v1767 = vadd.f32 %v1567, %v1743
      %v1768 = vadd.f32 %v1568, %v1744
      %v1769 = vadd.f32 %v1569, %v1745
      %v1770 = vadd.f32 %v1570, %v1746
      %v1771 = vadd.f32 %v1571, %v1747
      %v1772 = vadd.f32 %v1572, %v1748
      %v1773 = vadd.f32 %v1573, %v1749
      %v1774 = vadd.f32 %v1574, %v1750
      %v1775 = vadd.f32 %v1575, %v1751
      %v1776 = vadd.f32 %v1576, %v1752
      %1777 = vrot.lane.b32.xlu0 %v516, 113
      %v1778 = vpop.permute.xlu0 %1777
      %1779 = vrot.lane.b32.xlu0 %v518, 113
      %v1780 = vpop.permute.xlu0 %1779
      %1781 = vrot.lane.b32.xlu0 %v521, 113
      %v1782 = vpop.permute.xlu0 %1781
      %1783 = vrot.lane.b32.xlu0 %v523, 113
      %v1784 = vpop.permute.xlu0 %1783
      %1785 = vrot.lane.b32.xlu0 %v526, 113
      %v1786 = vpop.permute.xlu0 %1785
      %1787 = vrot.lane.b32.xlu0 %v528, 113
      %v1788 = vpop.permute.xlu0 %1787
      %1789 = vrot.lane.b32.xlu0 %v531, 113
      %v1790 = vpop.permute.xlu0 %1789
      %1791 = vrot.lane.b32.xlu0 %v533, 113
      %v1792 = vpop.permute.xlu0 %1791
      %1793 = vrot.lane.b32.xlu0 %v536, 113
      %v1794 = vpop.permute.xlu0 %1793
      %1795 = vrot.lane.b32.xlu0 %v538, 113
      %v1796 = vpop.permute.xlu0 %1795
      %1797 = vrot.lane.b32.xlu0 %v541, 113
      %v1798 = vpop.permute.xlu0 %1797
      %1799 = vrot.lane.b32.xlu0 %v543, 113
      %v1800 = vpop.permute.xlu0 %1799
      %1801 = vrot.lane.b32.xlu0 %v555, 113
      %v1802 = vpop.permute.xlu0 %1801
      %1803 = vrot.lane.b32.xlu0 %v557, 113
      %v1804 = vpop.permute.xlu0 %1803
      %1805 = vrot.lane.b32.xlu0 %v560, 113
      %v1806 = vpop.permute.xlu0 %1805
      %1807 = vrot.lane.b32.xlu0 %v562, 113
      %v1808 = vpop.permute.xlu0 %1807
      %1809 = vrot.lane.b32.xlu0 %v565, 113
      %v1810 = vpop.permute.xlu0 %1809
      %1811 = vrot.lane.b32.xlu0 %v567, 113
      %v1812 = vpop.permute.xlu0 %1811
      %1813 = vrot.lane.b32.xlu0 %v570, 113
      %v1814 = vpop.permute.xlu0 %1813
      %1815 = vrot.lane.b32.xlu0 %v572, 113
      %v1816 = vpop.permute.xlu0 %1815
      %1817 = vrot.lane.b32.xlu0 %v575, 113
      %v1818 = vpop.permute.xlu0 %1817
      %1819 = vrot.lane.b32.xlu0 %v577, 113
      %v1820 = vpop.permute.xlu0 %1819
      %1821 = vrot.lane.b32.xlu0 %v580, 113
      %v1822 = vpop.permute.xlu0 %1821
      %1823 = vrot.lane.b32.xlu0 %v582, 113
      %v1824 = vpop.permute.xlu0 %1823
      %vm1825 = vcmp.lt.s32.totalorder %v825, 113
      %v1826 = vsel %vm1825, %v1778, %v1802
      %v1827 = vsel %vm1825, %v1780, %v1804
      %v1828 = vsel %vm1825, %v1782, %v1806
      %v1829 = vsel %vm1825, %v1784, %v1808
      %v1830 = vsel %vm1825, %v1786, %v1810
      %v1831 = vsel %vm1825, %v1788, %v1812
      %v1832 = vsel %vm1825, %v1790, %v1814
      %v1833 = vsel %vm1825, %v1792, %v1816
      %v1834 = vsel %vm1825, %v1794, %v1818
      %v1835 = vsel %vm1825, %v1796, %v1820
      %v1836 = vsel %vm1825, %v1798, %v1822
      %v1837 = vsel %vm1825, %v1800, %v1824
      %v1838 = vsel %vm1825, %v1802, %v1778
      %v1839 = vsel %vm1825, %v1804, %v1780
      %v1840 = vsel %vm1825, %v1806, %v1782
      %v1841 = vsel %vm1825, %v1808, %v1784
      %v1842 = vsel %vm1825, %v1810, %v1786
      %v1843 = vsel %vm1825, %v1812, %v1788
      %v1844 = vsel %vm1825, %v1814, %v1790
      %v1845 = vsel %vm1825, %v1816, %v1792
      %v1846 = vsel %vm1825, %v1818, %v1794
      %v1847 = vsel %vm1825, %v1820, %v1796
      %v1848 = vsel %vm1825, %v1822, %v1798
      %v1849 = vsel %vm1825, %v1824, %v1800
      %s1850 = scalar_lea.vmem %s8, 6
      %v1851 = vld [vmem:[%s1850] ss:$8 sm:$0x3]
      %v1853 = vperm.slane %v1851, 0
      %v1854 = vperm.slane %v1851, 1
      %v1857 = vmul.f32 %v1826, %v1853
      %v1858 = vmul.f32 %v1838, %v1854
      %v1859 = vmul.f32 %v1827, %v1853
      %v1860 = vmul.f32 %v1839, %v1854
      %v1861 = vmul.f32 %v1828, %v1853
      %v1862 = vmul.f32 %v1840, %v1854
      %v1863 = vmul.f32 %v1829, %v1853
      %v1864 = vmul.f32 %v1841, %v1854
      %v1865 = vmul.f32 %v1830, %v1853
      %v1866 = vmul.f32 %v1842, %v1854
      %v1867 = vmul.f32 %v1831, %v1853
      %v1868 = vmul.f32 %v1843, %v1854
      %v1869 = vmul.f32 %v1832, %v1853
      %v1870 = vmul.f32 %v1844, %v1854
      %v1871 = vmul.f32 %v1833, %v1853
      %v1872 = vmul.f32 %v1845, %v1854
      %v1873 = vmul.f32 %v1834, %v1853
      %v1874 = vmul.f32 %v1846, %v1854
      %v1875 = vmul.f32 %v1835, %v1853
      %v1876 = vmul.f32 %v1847, %v1854
      %v1877 = vmul.f32 %v1836, %v1853
      %v1878 = vmul.f32 %v1848, %v1854
      %v1879 = vmul.f32 %v1837, %v1853
      %v1880 = vmul.f32 %v1849, %v1854
      %1881 = vset.pattern.permute.xlu0 6
      %1882 = vperm.xlu0 %1881, %v584
      %v1883 = vpop.permute.xlu0 %1882
      %1885 = vset.pattern.permute.xlu0 6
      %1886 = vperm.xlu0 %1885, %v585
      %v1887 = vpop.permute.xlu0 %1886
      %1889 = vset.pattern.permute.xlu0 6
      %1890 = vperm.xlu0 %1889, %v586
      %v1891 = vpop.permute.xlu0 %1890
      %1893 = vset.pattern.permute.xlu0 6
      %1894 = vperm.xlu0 %1893, %v587
      %v1895 = vpop.permute.xlu0 %1894
      %1897 = vset.pattern.permute.xlu0 6
      %1898 = vperm.xlu0 %1897, %v588
      %v1899 = vpop.permute.xlu0 %1898
      %1901 = vset.pattern.permute.xlu0 6
      %1902 = vperm.xlu0 %1901, %v589
      %v1903 = vpop.permute.xlu0 %1902
      %1905 = vset.pattern.permute.xlu0 6
      %1906 = vperm.xlu0 %1905, %v590
      %v1907 = vpop.permute.xlu0 %1906
      %1909 = vset.pattern.permute.xlu0 6
      %1910 = vperm.xlu0 %1909, %v591
      %v1911 = vpop.permute.xlu0 %1910
      %1913 = vset.pattern.permute.xlu0 6
      %1914 = vperm.xlu0 %1913, %v592
      %v1915 = vpop.permute.xlu0 %1914
      %1917 = vset.pattern.permute.xlu0 6
      %1918 = vperm.xlu0 %1917, %v593
      %v1919 = vpop.permute.xlu0 %1918
      %1921 = vset.pattern.permute.xlu0 6
      %1922 = vperm.xlu0 %1921, %v594
      %v1923 = vpop.permute.xlu0 %1922
      %1925 = vset.pattern.permute.xlu0 6
      %1926 = vperm.xlu0 %1925, %v595
      %v1927 = vpop.permute.xlu0 %1926
      %v1929 = vmul.f32 %v1857, %v1883
      %v1930 = vmul.f32 %v1858, %v1883
      %v1931 = vmul.f32 %v1859, %v1887
      %v1932 = vmul.f32 %v1860, %v1887
      %v1933 = vmul.f32 %v1861, %v1891
      %v1934 = vmul.f32 %v1862, %v1891
      %v1935 = vmul.f32 %v1863, %v1895
      %v1936 = vmul.f32 %v1864, %v1895
      %v1937 = vmul.f32 %v1865, %v1899
      %v1938 = vmul.f32 %v1866, %v1899
      %v1939 = vmul.f32 %v1867, %v1903
      %v1940 = vmul.f32 %v1868, %v1903
      %v1941 = vmul.f32 %v1869, %v1907
      %v1942 = vmul.f32 %v1870, %v1907
      %v1943 = vmul.f32 %v1871, %v1911
      %v1944 = vmul.f32 %v1872, %v1911
      %v1945 = vmul.f32 %v1873, %v1915
      %v1946 = vmul.f32 %v1874, %v1915
      %v1947 = vmul.f32 %v1875, %v1919
      %v1948 = vmul.f32 %v1876, %v1919
      %v1949 = vmul.f32 %v1877, %v1923
      %v1950 = vmul.f32 %v1878, %v1923
      %v1951 = vmul.f32 %v1879, %v1927
      %v1952 = vmul.f32 %v1880, %v1927
      %v1953 = vadd.f32 %v1753, %v1929
      %v1954 = vadd.f32 %v1754, %v1930
      %v1955 = vadd.f32 %v1755, %v1931
      %v1956 = vadd.f32 %v1756, %v1932
      %v1957 = vadd.f32 %v1757, %v1933
      %v1958 = vadd.f32 %v1758, %v1934
      %v1959 = vadd.f32 %v1759, %v1935
      %v1960 = vadd.f32 %v1760, %v1936
      %v1961 = vadd.f32 %v1761, %v1937
      %v1962 = vadd.f32 %v1762, %v1938
      %v1963 = vadd.f32 %v1763, %v1939
      %v1964 = vadd.f32 %v1764, %v1940
      %v1965 = vadd.f32 %v1765, %v1941
      %v1966 = vadd.f32 %v1766, %v1942
      %v1967 = vadd.f32 %v1767, %v1943
      %v1968 = vadd.f32 %v1768, %v1944
      %v1969 = vadd.f32 %v1769, %v1945
      %v1970 = vadd.f32 %v1770, %v1946
      %v1971 = vadd.f32 %v1771, %v1947
      %v1972 = vadd.f32 %v1772, %v1948
      %v1973 = vadd.f32 %v1773, %v1949
      %v1974 = vadd.f32 %v1774, %v1950
      %v1975 = vadd.f32 %v1775, %v1951
      %v1976 = vadd.f32 %v1776, %v1952
      %1977 = vrot.lane.b32.xlu0 %v516, 112
      %v1978 = vpop.permute.xlu0 %1977
      %1979 = vrot.lane.b32.xlu0 %v518, 112
      %v1980 = vpop.permute.xlu0 %1979
      %1981 = vrot.lane.b32.xlu0 %v521, 112
      %v1982 = vpop.permute.xlu0 %1981
      %1983 = vrot.lane.b32.xlu0 %v523, 112
      %v1984 = vpop.permute.xlu0 %1983
      %1985 = vrot.lane.b32.xlu0 %v526, 112
      %v1986 = vpop.permute.xlu0 %1985
      %1987 = vrot.lane.b32.xlu0 %v528, 112
      %v1988 = vpop.permute.xlu0 %1987
      %1989 = vrot.lane.b32.xlu0 %v531, 112
      %v1990 = vpop.permute.xlu0 %1989
      %1991 = vrot.lane.b32.xlu0 %v533, 112
      %v1992 = vpop.permute.xlu0 %1991
      %1993 = vrot.lane.b32.xlu0 %v536, 112
      %v1994 = vpop.permute.xlu0 %1993
      %1995 = vrot.lane.b32.xlu0 %v538, 112
      %v1996 = vpop.permute.xlu0 %1995
      %1997 = vrot.lane.b32.xlu0 %v541, 112
      %v1998 = vpop.permute.xlu0 %1997
      %1999 = vrot.lane.b32.xlu0 %v543, 112
      %v2000 = vpop.permute.xlu0 %1999
      %2001 = vrot.lane.b32.xlu0 %v555, 112
      %v2002 = vpop.permute.xlu0 %2001
      %2003 = vrot.lane.b32.xlu0 %v557, 112
      %v2004 = vpop.permute.xlu0 %2003
      %2005 = vrot.lane.b32.xlu0 %v560, 112
      %v2006 = vpop.permute.xlu0 %2005
      %2007 = vrot.lane.b32.xlu0 %v562, 112
      %v2008 = vpop.permute.xlu0 %2007
      %2009 = vrot.lane.b32.xlu0 %v565, 112
      %v2010 = vpop.permute.xlu0 %2009
      %2011 = vrot.lane.b32.xlu0 %v567, 112
      %v2012 = vpop.permute.xlu0 %2011
      %2013 = vrot.lane.b32.xlu0 %v570, 112
      %v2014 = vpop.permute.xlu0 %2013
      %2015 = vrot.lane.b32.xlu0 %v572, 112
      %v2016 = vpop.permute.xlu0 %2015
      %2017 = vrot.lane.b32.xlu0 %v575, 112
      %v2018 = vpop.permute.xlu0 %2017
      %2019 = vrot.lane.b32.xlu0 %v577, 112
      %v2020 = vpop.permute.xlu0 %2019
      %2021 = vrot.lane.b32.xlu0 %v580, 112
      %v2022 = vpop.permute.xlu0 %2021
      %2023 = vrot.lane.b32.xlu0 %v582, 112
      %v2024 = vpop.permute.xlu0 %2023
      %vm2025 = vcmp.lt.s32.totalorder %v825, 112
      %v2026 = vsel %vm2025, %v1978, %v2002
      %v2027 = vsel %vm2025, %v1980, %v2004
      %v2028 = vsel %vm2025, %v1982, %v2006
      %v2029 = vsel %vm2025, %v1984, %v2008
      %v2030 = vsel %vm2025, %v1986, %v2010
      %v2031 = vsel %vm2025, %v1988, %v2012
      %v2032 = vsel %vm2025, %v1990, %v2014
      %v2033 = vsel %vm2025, %v1992, %v2016
      %v2034 = vsel %vm2025, %v1994, %v2018
      %v2035 = vsel %vm2025, %v1996, %v2020
      %v2036 = vsel %vm2025, %v1998, %v2022
      %v2037 = vsel %vm2025, %v2000, %v2024
      %v2038 = vsel %vm2025, %v2002, %v1978
      %v2039 = vsel %vm2025, %v2004, %v1980
      %v2040 = vsel %vm2025, %v2006, %v1982
      %v2041 = vsel %vm2025, %v2008, %v1984
      %v2042 = vsel %vm2025, %v2010, %v1986
      %v2043 = vsel %vm2025, %v2012, %v1988
      %v2044 = vsel %vm2025, %v2014, %v1990
      %v2045 = vsel %vm2025, %v2016, %v1992
      %v2046 = vsel %vm2025, %v2018, %v1994
      %v2047 = vsel %vm2025, %v2020, %v1996
      %v2048 = vsel %vm2025, %v2022, %v1998
      %v2049 = vsel %vm2025, %v2024, %v2000
      %s2050 = scalar_lea.vmem %s8, 7
      %v2051 = vld [vmem:[%s2050] ss:$8 sm:$0x3]
      %v2053 = vperm.slane %v2051, 0
      %v2054 = vperm.slane %v2051, 1
      %v2057 = vmul.f32 %v2026, %v2053
      %v2058 = vmul.f32 %v2038, %v2054
      %v2059 = vmul.f32 %v2027, %v2053
      %v2060 = vmul.f32 %v2039, %v2054
      %v2061 = vmul.f32 %v2028, %v2053
      %v2062 = vmul.f32 %v2040, %v2054
      %v2063 = vmul.f32 %v2029, %v2053
      %v2064 = vmul.f32 %v2041, %v2054
      %v2065 = vmul.f32 %v2030, %v2053
      %v2066 = vmul.f32 %v2042, %v2054
      %v2067 = vmul.f32 %v2031, %v2053
      %v2068 = vmul.f32 %v2043, %v2054
      %v2069 = vmul.f32 %v2032, %v2053
      %v2070 = vmul.f32 %v2044, %v2054
      %v2071 = vmul.f32 %v2033, %v2053
      %v2072 = vmul.f32 %v2045, %v2054
      %v2073 = vmul.f32 %v2034, %v2053
      %v2074 = vmul.f32 %v2046, %v2054
      %v2075 = vmul.f32 %v2035, %v2053
      %v2076 = vmul.f32 %v2047, %v2054
      %v2077 = vmul.f32 %v2036, %v2053
      %v2078 = vmul.f32 %v2048, %v2054
      %v2079 = vmul.f32 %v2037, %v2053
      %v2080 = vmul.f32 %v2049, %v2054
      %2081 = vset.pattern.permute.xlu0 7
      %2082 = vperm.xlu0 %2081, %v584
      %v2083 = vpop.permute.xlu0 %2082
      %2085 = vset.pattern.permute.xlu0 7
      %2086 = vperm.xlu0 %2085, %v585
      %v2087 = vpop.permute.xlu0 %2086
      %2089 = vset.pattern.permute.xlu0 7
      %2090 = vperm.xlu0 %2089, %v586
      %v2091 = vpop.permute.xlu0 %2090
      %2093 = vset.pattern.permute.xlu0 7
      %2094 = vperm.xlu0 %2093, %v587
      %v2095 = vpop.permute.xlu0 %2094
      %2097 = vset.pattern.permute.xlu0 7
      %2098 = vperm.xlu0 %2097, %v588
      %v2099 = vpop.permute.xlu0 %2098
      %2101 = vset.pattern.permute.xlu0 7
      %2102 = vperm.xlu0 %2101, %v589
      %v2103 = vpop.permute.xlu0 %2102
      %2105 = vset.pattern.permute.xlu0 7
      %2106 = vperm.xlu0 %2105, %v590
      %v2107 = vpop.permute.xlu0 %2106
      %2109 = vset.pattern.permute.xlu0 7
      %2110 = vperm.xlu0 %2109, %v591
      %v2111 = vpop.permute.xlu0 %2110
      %2113 = vset.pattern.permute.xlu0 7
      %2114 = vperm.xlu0 %2113, %v592
      %v2115 = vpop.permute.xlu0 %2114
      %2117 = vset.pattern.permute.xlu0 7
      %2118 = vperm.xlu0 %2117, %v593
      %v2119 = vpop.permute.xlu0 %2118
      %2121 = vset.pattern.permute.xlu0 7
      %2122 = vperm.xlu0 %2121, %v594
      %v2123 = vpop.permute.xlu0 %2122
      %2125 = vset.pattern.permute.xlu0 7
      %2126 = vperm.xlu0 %2125, %v595
      %v2127 = vpop.permute.xlu0 %2126
      %v2129 = vmul.f32 %v2057, %v2083
      %v2130 = vmul.f32 %v2058, %v2083
      %v2131 = vmul.f32 %v2059, %v2087
      %v2132 = vmul.f32 %v2060, %v2087
      %v2133 = vmul.f32 %v2061, %v2091
      %v2134 = vmul.f32 %v2062, %v2091
      %v2135 = vmul.f32 %v2063, %v2095
      %v2136 = vmul.f32 %v2064, %v2095
      %v2137 = vmul.f32 %v2065, %v2099
      %v2138 = vmul.f32 %v2066, %v2099
      %v2139 = vmul.f32 %v2067, %v2103
      %v2140 = vmul.f32 %v2068, %v2103
      %v2141 = vmul.f32 %v2069, %v2107
      %v2142 = vmul.f32 %v2070, %v2107
      %v2143 = vmul.f32 %v2071, %v2111
      %v2144 = vmul.f32 %v2072, %v2111
      %v2145 = vmul.f32 %v2073, %v2115
      %v2146 = vmul.f32 %v2074, %v2115
      %v2147 = vmul.f32 %v2075, %v2119
      %v2148 = vmul.f32 %v2076, %v2119
      %v2149 = vmul.f32 %v2077, %v2123
      %v2150 = vmul.f32 %v2078, %v2123
      %v2151 = vmul.f32 %v2079, %v2127
      %v2152 = vmul.f32 %v2080, %v2127
      %v2153 = vadd.f32 %v1953, %v2129
      %v2154 = vadd.f32 %v1954, %v2130
      %v2155 = vadd.f32 %v1955, %v2131
      %v2156 = vadd.f32 %v1956, %v2132
      %v2157 = vadd.f32 %v1957, %v2133
      %v2158 = vadd.f32 %v1958, %v2134
      %v2159 = vadd.f32 %v1959, %v2135
      %v2160 = vadd.f32 %v1960, %v2136
      %v2161 = vadd.f32 %v1961, %v2137
      %v2162 = vadd.f32 %v1962, %v2138
      %v2163 = vadd.f32 %v1963, %v2139
      %v2164 = vadd.f32 %v1964, %v2140
      %v2165 = vadd.f32 %v1965, %v2141
      %v2166 = vadd.f32 %v1966, %v2142
      %v2167 = vadd.f32 %v1967, %v2143
      %v2168 = vadd.f32 %v1968, %v2144
      %v2169 = vadd.f32 %v1969, %v2145
      %v2170 = vadd.f32 %v1970, %v2146
      %v2171 = vadd.f32 %v1971, %v2147
      %v2172 = vadd.f32 %v1972, %v2148
      %v2173 = vadd.f32 %v1973, %v2149
      %v2174 = vadd.f32 %v1974, %v2150
      %v2175 = vadd.f32 %v1975, %v2151
      %v2176 = vadd.f32 %v1976, %v2152
      %2177 = vrot.lane.b32.xlu0 %v516, 111
      %v2178 = vpop.permute.xlu0 %2177
      %2179 = vrot.lane.b32.xlu0 %v518, 111
      %v2180 = vpop.permute.xlu0 %2179
      %2181 = vrot.lane.b32.xlu0 %v521, 111
      %v2182 = vpop.permute.xlu0 %2181
      %2183 = vrot.lane.b32.xlu0 %v523, 111
      %v2184 = vpop.permute.xlu0 %2183
      %2185 = vrot.lane.b32.xlu0 %v526, 111
      %v2186 = vpop.permute.xlu0 %2185
      %2187 = vrot.lane.b32.xlu0 %v528, 111
      %v2188 = vpop.permute.xlu0 %2187
      %2189 = vrot.lane.b32.xlu0 %v531, 111
      %v2190 = vpop.permute.xlu0 %2189
      %2191 = vrot.lane.b32.xlu0 %v533, 111
      %v2192 = vpop.permute.xlu0 %2191
      %2193 = vrot.lane.b32.xlu0 %v536, 111
      %v2194 = vpop.permute.xlu0 %2193
      %2195 = vrot.lane.b32.xlu0 %v538, 111
      %v2196 = vpop.permute.xlu0 %2195
      %2197 = vrot.lane.b32.xlu0 %v541, 111
      %v2198 = vpop.permute.xlu0 %2197
      %2199 = vrot.lane.b32.xlu0 %v543, 111
      %v2200 = vpop.permute.xlu0 %2199
      %2201 = vrot.lane.b32.xlu0 %v555, 111
      %v2202 = vpop.permute.xlu0 %2201
      %2203 = vrot.lane.b32.xlu0 %v557, 111
      %v2204 = vpop.permute.xlu0 %2203
      %2205 = vrot.lane.b32.xlu0 %v560, 111
      %v2206 = vpop.permute.xlu0 %2205
      %2207 = vrot.lane.b32.xlu0 %v562, 111
      %v2208 = vpop.permute.xlu0 %2207
      %2209 = vrot.lane.b32.xlu0 %v565, 111
      %v2210 = vpop.permute.xlu0 %2209
      %2211 = vrot.lane.b32.xlu0 %v567, 111
      %v2212 = vpop.permute.xlu0 %2211
      %2213 = vrot.lane.b32.xlu0 %v570, 111
      %v2214 = vpop.permute.xlu0 %2213
      %2215 = vrot.lane.b32.xlu0 %v572, 111
      %v2216 = vpop.permute.xlu0 %2215
      %2217 = vrot.lane.b32.xlu0 %v575, 111
      %v2218 = vpop.permute.xlu0 %2217
      %2219 = vrot.lane.b32.xlu0 %v577, 111
      %v2220 = vpop.permute.xlu0 %2219
      %2221 = vrot.lane.b32.xlu0 %v580, 111
      %v2222 = vpop.permute.xlu0 %2221
      %2223 = vrot.lane.b32.xlu0 %v582, 111
      %v2224 = vpop.permute.xlu0 %2223
      %vm2225 = vcmp.lt.s32.totalorder %v825, 111
      %v2226 = vsel %vm2225, %v2178, %v2202
      %v2227 = vsel %vm2225, %v2180, %v2204
      %v2228 = vsel %vm2225, %v2182, %v2206
      %v2229 = vsel %vm2225, %v2184, %v2208
      %v2230 = vsel %vm2225, %v2186, %v2210
      %v2231 = vsel %vm2225, %v2188, %v2212
      %v2232 = vsel %vm2225, %v2190, %v2214
      %v2233 = vsel %vm2225, %v2192, %v2216
      %v2234 = vsel %vm2225, %v2194, %v2218
      %v2235 = vsel %vm2225, %v2196, %v2220
      %v2236 = vsel %vm2225, %v2198, %v2222
      %v2237 = vsel %vm2225, %v2200, %v2224
      %v2238 = vsel %vm2225, %v2202, %v2178
      %v2239 = vsel %vm2225, %v2204, %v2180
      %v2240 = vsel %vm2225, %v2206, %v2182
      %v2241 = vsel %vm2225, %v2208, %v2184
      %v2242 = vsel %vm2225, %v2210, %v2186
      %v2243 = vsel %vm2225, %v2212, %v2188
      %v2244 = vsel %vm2225, %v2214, %v2190
      %v2245 = vsel %vm2225, %v2216, %v2192
      %v2246 = vsel %vm2225, %v2218, %v2194
      %v2247 = vsel %vm2225, %v2220, %v2196
      %v2248 = vsel %vm2225, %v2222, %v2198
      %v2249 = vsel %vm2225, %v2224, %v2200
      %s2250 = scalar_lea.vmem %s8, 16
      %v2251 = vld [vmem:[%s2250] ss:$8 sm:$0x3]
      %v2253 = vperm.slane %v2251, 0
      %v2254 = vperm.slane %v2251, 1
      %v2257 = vmul.f32 %v2226, %v2253
      %v2258 = vmul.f32 %v2238, %v2254
      %v2259 = vmul.f32 %v2227, %v2253
      %v2260 = vmul.f32 %v2239, %v2254
      %v2261 = vmul.f32 %v2228, %v2253
      %v2262 = vmul.f32 %v2240, %v2254
      %v2263 = vmul.f32 %v2229, %v2253
      %v2264 = vmul.f32 %v2241, %v2254
      %v2265 = vmul.f32 %v2230, %v2253
      %v2266 = vmul.f32 %v2242, %v2254
      %v2267 = vmul.f32 %v2231, %v2253
      %v2268 = vmul.f32 %v2243, %v2254
      %v2269 = vmul.f32 %v2232, %v2253
      %v2270 = vmul.f32 %v2244, %v2254
      %v2271 = vmul.f32 %v2233, %v2253
      %v2272 = vmul.f32 %v2245, %v2254
      %v2273 = vmul.f32 %v2234, %v2253
      %v2274 = vmul.f32 %v2246, %v2254
      %v2275 = vmul.f32 %v2235, %v2253
      %v2276 = vmul.f32 %v2247, %v2254
      %v2277 = vmul.f32 %v2236, %v2253
      %v2278 = vmul.f32 %v2248, %v2254
      %v2279 = vmul.f32 %v2237, %v2253
      %v2280 = vmul.f32 %v2249, %v2254
      %2281 = vset.pattern.permute.xlu0 8
      %2282 = vperm.xlu0 %2281, %v584
      %v2283 = vpop.permute.xlu0 %2282
      %2285 = vset.pattern.permute.xlu0 8
      %2286 = vperm.xlu0 %2285, %v585
      %v2287 = vpop.permute.xlu0 %2286
      %2289 = vset.pattern.permute.xlu0 8
      %2290 = vperm.xlu0 %2289, %v586
      %v2291 = vpop.permute.xlu0 %2290
      %2293 = vset.pattern.permute.xlu0 8
      %2294 = vperm.xlu0 %2293, %v587
      %v2295 = vpop.permute.xlu0 %2294
      %2297 = vset.pattern.permute.xlu0 8
      %2298 = vperm.xlu0 %2297, %v588
      %v2299 = vpop.permute.xlu0 %2298
      %2301 = vset.pattern.permute.xlu0 8
      %2302 = vperm.xlu0 %2301, %v589
      %v2303 = vpop.permute.xlu0 %2302
      %2305 = vset.pattern.permute.xlu0 8
      %2306 = vperm.xlu0 %2305, %v590
      %v2307 = vpop.permute.xlu0 %2306
      %2309 = vset.pattern.permute.xlu0 8
      %2310 = vperm.xlu0 %2309, %v591
      %v2311 = vpop.permute.xlu0 %2310
      %2313 = vset.pattern.permute.xlu0 8
      %2314 = vperm.xlu0 %2313, %v592
      %v2315 = vpop.permute.xlu0 %2314
      %2317 = vset.pattern.permute.xlu0 8
      %2318 = vperm.xlu0 %2317, %v593
      %v2319 = vpop.permute.xlu0 %2318
      %2321 = vset.pattern.permute.xlu0 8
      %2322 = vperm.xlu0 %2321, %v594
      %v2323 = vpop.permute.xlu0 %2322
      %2325 = vset.pattern.permute.xlu0 8
      %2326 = vperm.xlu0 %2325, %v595
      %v2327 = vpop.permute.xlu0 %2326
      %v2329 = vmul.f32 %v2257, %v2283
      %v2330 = vmul.f32 %v2258, %v2283
      %v2331 = vmul.f32 %v2259, %v2287
      %v2332 = vmul.f32 %v2260, %v2287
      %v2333 = vmul.f32 %v2261, %v2291
      %v2334 = vmul.f32 %v2262, %v2291
      %v2335 = vmul.f32 %v2263, %v2295
      %v2336 = vmul.f32 %v2264, %v2295
      %v2337 = vmul.f32 %v2265, %v2299
      %v2338 = vmul.f32 %v2266, %v2299
      %v2339 = vmul.f32 %v2267, %v2303
      %v2340 = vmul.f32 %v2268, %v2303
      %v2341 = vmul.f32 %v2269, %v2307
      %v2342 = vmul.f32 %v2270, %v2307
      %v2343 = vmul.f32 %v2271, %v2311
      %v2344 = vmul.f32 %v2272, %v2311
      %v2345 = vmul.f32 %v2273, %v2315
      %v2346 = vmul.f32 %v2274, %v2315
      %v2347 = vmul.f32 %v2275, %v2319
      %v2348 = vmul.f32 %v2276, %v2319
      %v2349 = vmul.f32 %v2277, %v2323
      %v2350 = vmul.f32 %v2278, %v2323
      %v2351 = vmul.f32 %v2279, %v2327
      %v2352 = vmul.f32 %v2280, %v2327
      %v2353 = vadd.f32 %v2153, %v2329
      %v2354 = vadd.f32 %v2154, %v2330
      %v2355 = vadd.f32 %v2155, %v2331
      %v2356 = vadd.f32 %v2156, %v2332
      %v2357 = vadd.f32 %v2157, %v2333
      %v2358 = vadd.f32 %v2158, %v2334
      %v2359 = vadd.f32 %v2159, %v2335
      %v2360 = vadd.f32 %v2160, %v2336
      %v2361 = vadd.f32 %v2161, %v2337
      %v2362 = vadd.f32 %v2162, %v2338
      %v2363 = vadd.f32 %v2163, %v2339
      %v2364 = vadd.f32 %v2164, %v2340
      %v2365 = vadd.f32 %v2165, %v2341
      %v2366 = vadd.f32 %v2166, %v2342
      %v2367 = vadd.f32 %v2167, %v2343
      %v2368 = vadd.f32 %v2168, %v2344
      %v2369 = vadd.f32 %v2169, %v2345
      %v2370 = vadd.f32 %v2170, %v2346
      %v2371 = vadd.f32 %v2171, %v2347
      %v2372 = vadd.f32 %v2172, %v2348
      %v2373 = vadd.f32 %v2173, %v2349
      %v2374 = vadd.f32 %v2174, %v2350
      %v2375 = vadd.f32 %v2175, %v2351
      %v2376 = vadd.f32 %v2176, %v2352
      %v2377 = vmul.f32 %v2353, %v2353
      %v2378 = vmul.f32 %v2354, %v2354
      %v2379 = vmul.f32 %v2355, %v2355
      %v2380 = vmul.f32 %v2356, %v2356
      %v2381 = vmul.f32 %v2357, %v2357
      %v2382 = vmul.f32 %v2358, %v2358
      %v2383 = vmul.f32 %v2359, %v2359
      %v2384 = vmul.f32 %v2360, %v2360
      %v2385 = vadd.f32 %v2377, %v2378
      %2386 = vadd.xlane.f32.xlu0 %v2385
      %v2387 = vpop.xlane.xlu0 %2386
      %v2388 = vadd.f32 %v2379, %v2380
      %2389 = vadd.xlane.f32.xlu0 %v2388
      %v2390 = vpop.xlane.xlu0 %2389
      %v2391 = vadd.f32 %v2381, %v2382
      %2392 = vadd.xlane.f32.xlu0 %v2391
      %v2393 = vpop.xlane.xlu0 %2392
      %v2394 = vadd.f32 %v2383, %v2384
      %2395 = vadd.xlane.f32.xlu0 %v2394
      %v2396 = vpop.xlane.xlu0 %2395
      %v2397 = vmax.f32 %v2387, 1e-24
      %v2398 = vmax.f32 %v2390, 1e-24
      %v2399 = vmax.f32 %v2393, 1e-24
      %v2400 = vmax.f32 %v2396, 1e-24
      %v2401 = vrsqrt.pop %v2397
      %v2402 = vmul.f32 %v2401, %v2397
      %v2403 = vmul.f32 %v2402, %v2401
      %v2404 = vmul.f32 0.5, %v2403
      %v2405 = vsub.f32 1.5, %v2404
      %v2406 = vmul.f32 %v2401, %v2405
      %vm2407 = vweird.f32 %v2397
      %vm2408 = vweird.f32 %v2401
      %vm2409 = vmor %vm2407, %vm2408
      %v2410 = vsel %vm2409, %v2401, %v2406
      %v2411 = vrsqrt.pop %v2398
      %v2412 = vmul.f32 %v2411, %v2398
      %v2413 = vmul.f32 %v2412, %v2411
      %v2414 = vmul.f32 0.5, %v2413
      %v2415 = vsub.f32 1.5, %v2414
      %v2416 = vmul.f32 %v2411, %v2415
      %vm2417 = vweird.f32 %v2398
      %vm2418 = vweird.f32 %v2411
      %vm2419 = vmor %vm2417, %vm2418
      %v2420 = vsel %vm2419, %v2411, %v2416
      %v2421 = vrsqrt.pop %v2399
      %v2422 = vmul.f32 %v2421, %v2399
      %v2423 = vmul.f32 %v2422, %v2421
      %v2424 = vmul.f32 0.5, %v2423
      %v2425 = vsub.f32 1.5, %v2424
      %v2426 = vmul.f32 %v2421, %v2425
      %vm2427 = vweird.f32 %v2399
      %vm2428 = vweird.f32 %v2421
      %vm2429 = vmor %vm2427, %vm2428
      %v2430 = vsel %vm2429, %v2421, %v2426
      %v2431 = vrsqrt.pop %v2400
      %v2432 = vmul.f32 %v2431, %v2400
      %v2433 = vmul.f32 %v2432, %v2431
      %v2434 = vmul.f32 0.5, %v2433
      %v2435 = vsub.f32 1.5, %v2434
      %v2436 = vmul.f32 %v2431, %v2435
      %vm2437 = vweird.f32 %v2400
      %vm2438 = vweird.f32 %v2431
      %vm2439 = vmor %vm2437, %vm2438
      %v2440 = vsel %vm2439, %v2431, %v2436
      %v2441 = vld [vmem:[%s5] sm:$0xff]
      %v2442 = vld [vmem:[%s5 + $0x8] sm:$0xff]
      %v2443 = vld [vmem:[%s5 + $0x10] sm:$0xff]
      %v2444 = vld [vmem:[%s5 + $0x18] sm:$0xff]
      %v2445 = vmul.f32 %v2410, %v2441
      %v2446 = vmul.f32 %v2420, %v2442
      %v2447 = vmul.f32 %v2430, %v2443
      %v2448 = vmul.f32 %v2440, %v2444
      %v2449 = vmul.f32 %v2361, %v2361
      %v2450 = vmul.f32 %v2362, %v2362
      %v2451 = vmul.f32 %v2363, %v2363
      %v2452 = vmul.f32 %v2364, %v2364
      %v2453 = vmul.f32 %v2365, %v2365
      %v2454 = vmul.f32 %v2366, %v2366
      %v2455 = vmul.f32 %v2367, %v2367
      %v2456 = vmul.f32 %v2368, %v2368
      %2457 = vmatpush.xpose.msra.mxu0 0.0
      %2458 = vmatpush.xpose.msra.mxu0 0.0
      %2459 = vmatpush.xpose.msra.mxu0 0.0
      %2460 = vmatpush.xpose.msra.mxu0 0.0
      %2461 = vmatpush.xpose.msra.mxu0 0.0
      %2462 = vmatpush.xpose.msra.mxu0 0.0
      %2463 = vmatpush.xpose.msra.mxu0 0.0
      %2464 = vmatpush.xpose.msra.mxu0 0.0
      %2465 = vmatpush.xpose.msra.mxu0 0.0
      %2466 = vmatpush.xpose.msra.mxu0 0.0
      %2467 = vmatpush.xpose.msra.mxu0 0.0
      %2468 = vmatpush.xpose.msra.mxu0 0.0
      %2469 = vmatpush.xpose.msra.mxu0 %v2455
      %2470 = vmatpush.xpose.msra.mxu0 %v2453
      %2471 = vmatpush.xpose.msra.mxu0 %v2451
      %2472 = vmatpush.xpose.msra.mxu0 %v2449
      %2473 = vmatmul.f32.gmra.mxu0 1.0
      %v2474 = vpop.f32.mrf.mxu0
      %v2475 = vadd.f32 0.0, %v2474
      %2476 = vdwg.mxu0
      %2477 = vmatpush.xpose.msra.mxu0 0.0
      %2478 = vmatpush.xpose.msra.mxu0 0.0
      %2479 = vmatpush.xpose.msra.mxu0 0.0
      %2480 = vmatpush.xpose.msra.mxu0 0.0
      %2481 = vmatpush.xpose.msra.mxu0 0.0
      %2482 = vmatpush.xpose.msra.mxu0 0.0
      %2483 = vmatpush.xpose.msra.mxu0 0.0
      %2484 = vmatpush.xpose.msra.mxu0 0.0
      %2485 = vmatpush.xpose.msra.mxu0 0.0
      %2486 = vmatpush.xpose.msra.mxu0 0.0
      %2487 = vmatpush.xpose.msra.mxu0 0.0
      %2488 = vmatpush.xpose.msra.mxu0 0.0
      %2489 = vmatpush.xpose.msra.mxu0 %v2456
      %2490 = vmatpush.xpose.msra.mxu0 %v2454
      %2491 = vmatpush.xpose.msra.mxu0 %v2452
      %2492 = vmatpush.xpose.msra.mxu0 %v2450
      %2493 = vmatmul.f32.gmra.mxu0 1.0
      %v2494 = vpop.f32.mrf.mxu0
      %v2495 = vadd.f32 %v2475, %v2494
      %2496 = vdwg.mxu0
      %v2497 = vmax.f32 %v2495, 1e-24
      %v2498 = vrsqrt.pop %v2497
      %v2499 = vmul.f32 %v2498, %v2497
      %v2500 = vmul.f32 %v2499, %v2498
      %v2501 = vmul.f32 0.5, %v2500
      %v2502 = vsub.f32 1.5, %v2501
      %v2503 = vmul.f32 %v2498, %v2502
      %vm2504 = vweird.f32 %v2497
      %vm2505 = vweird.f32 %v2498
      %vm2506 = vmor %vm2504, %vm2505
      %v2507 = vsel %vm2506, %v2498, %v2503
      %v2508 = vpack.c.bf16 %v2355, %v2353
      %v2509 = vpack.c.bf16 %v2356, %v2354
      %v2510 = vpack.c.bf16 %v2359, %v2357
      %v2511 = vpack.c.bf16 %v2360, %v2358
      %v2512 = vpack.c.bf16 %v2363, %v2361
      %v2513 = vpack.c.bf16 %v2364, %v2362
      %v2514 = vpack.c.bf16 %v2367, %v2365
      %v2515 = vpack.c.bf16 %v2368, %v2366
      %2516 = vmatpush.bf16.xpose.msra.mxu0 0
      %2517 = vmatpush.bf16.xpose.msra.mxu0 0
      %2518 = vmatpush.bf16.xpose.msra.mxu0 0
      %2519 = vmatpush.bf16.xpose.msra.mxu0 0
      %2520 = vmatpush.bf16.xpose.msra.mxu0 0
      %2521 = vmatpush.bf16.xpose.msra.mxu0 0
      %2522 = vmatpush.bf16.xpose.msra.mxu0 %v2514
      %2523 = vmatpush.bf16.xpose.msra.mxu0 %v2512
      %2524 = vmatmul.bf16.gmra.mxu0 %v2508
      %v2525 = vpop.f32.mrf.mxu0
      %v2526 = vadd.f32 0.0, %v2525
      %v2527 = vpop.f32.mrf.mxu0
      %v2528 = vadd.f32 0.0, %v2527
      %2529 = vmatmul.bf16.gmra.mxu0 %v2510
      %v2530 = vpop.f32.mrf.mxu0
      %v2531 = vadd.f32 0.0, %v2530
      %v2532 = vpop.f32.mrf.mxu0
      %v2533 = vadd.f32 0.0, %v2532
      %2534 = vdwg.mxu0
      %2535 = vmatpush.bf16.xpose.msra.mxu0 0
      %2536 = vmatpush.bf16.xpose.msra.mxu0 0
      %2537 = vmatpush.bf16.xpose.msra.mxu0 0
      %2538 = vmatpush.bf16.xpose.msra.mxu0 0
      %2539 = vmatpush.bf16.xpose.msra.mxu0 0
      %2540 = vmatpush.bf16.xpose.msra.mxu0 0
      %2541 = vmatpush.bf16.xpose.msra.mxu0 %v2515
      %2542 = vmatpush.bf16.xpose.msra.mxu0 %v2513
      %2543 = vmatmul.bf16.gmra.mxu0 %v2509
      %v2544 = vpop.f32.mrf.mxu0
      %v2545 = vadd.f32 %v2526, %v2544
      %v2546 = vpop.f32.mrf.mxu0
      %v2547 = vadd.f32 %v2528, %v2546
      %2548 = vmatmul.bf16.gmra.mxu0 %v2511
      %v2549 = vpop.f32.mrf.mxu0
      %v2550 = vadd.f32 %v2531, %v2549
      %v2551 = vpop.f32.mrf.mxu0
      %v2552 = vadd.f32 %v2533, %v2551
      %2553 = vdwg.mxu0
      %2555 = vset.pattern.permute.xlu0 0
      %2556 = vperm.xlu0 %2555, %v2445
      %v2557 = vpop.permute.xlu0 %2556
      %2560 = vset.pattern.permute.xlu0 0
      %2561 = vperm.xlu0 %2560, %v2446
      %v2562 = vpop.permute.xlu0 %2561
      %2565 = vset.pattern.permute.xlu0 0
      %2566 = vperm.xlu0 %2565, %v2447
      %v2567 = vpop.permute.xlu0 %2566
      %2570 = vset.pattern.permute.xlu0 0
      %2571 = vperm.xlu0 %2570, %v2448
      %v2572 = vpop.permute.xlu0 %2571
      %v2574 = vmul.f32 %v2545, %v2557
      %v2575 = vmul.f32 %v2547, %v2562
      %v2576 = vmul.f32 %v2550, %v2567
      %v2577 = vmul.f32 %v2552, %v2572
      %v2578 = vperm.slane %v2507, 0
      %v2579 = vmul.f32 %v2574, %v2578
      %v2580 = vmul.f32 %v2575, %v2578
      %v2581 = vmul.f32 %v2576, %v2578
      %v2582 = vmul.f32 %v2577, %v2578
      %v2583 = vld [vmem:[%s9] sm:$0xff]
      %v2584 = vld [vmem:[%s9 + $0x8] sm:$0xff]
      %v2585 = vld [vmem:[%s9 + $0x10] sm:$0xff]
      %v2586 = vld [vmem:[%s9 + $0x18] sm:$0xff]
      %v2587 = vadd.f32 %v2579, %v2583
      %v2588 = vadd.f32 %v2580, %v2584
      %v2589 = vadd.f32 %v2581, %v2585
      %v2590 = vadd.f32 %v2582, %v2586
      %v2591 = vsel %vm487, %v2587, -inf
      %2592 = vmax.xlane.f32.xlu0 %v2591
      %v2593 = vpop.xlane.xlu0 %2592
      %v2594 = vsel %vm487, %v2588, -inf
      %2595 = vmax.xlane.f32.xlu0 %v2594
      %v2596 = vpop.xlane.xlu0 %2595
      %v2597 = vsel %vm487, %v2589, -inf
      %2598 = vmax.xlane.f32.xlu0 %v2597
      %v2599 = vpop.xlane.xlu0 %2598
      %v2600 = vsel %vm487, %v2590, -inf
      %2601 = vmax.xlane.f32.xlu0 %v2600
      %v2602 = vpop.xlane.xlu0 %2601
      %v2603 = vsub.f32 %v2587, %v2593
      %v2604 = vsub.f32 %v2588, %v2596
      %v2605 = vsub.f32 %v2589, %v2599
      %v2606 = vsub.f32 %v2590, %v2602
      %v2607 = vmul.f32 %v2603, 1.442695
      %v2608 = vpow.pop %v2607
      %v2609 = vmul.f32 %v2604, 1.442695
      %v2610 = vpow.pop %v2609
      %v2611 = vmul.f32 %v2605, 1.442695
      %v2612 = vpow.pop %v2611
      %v2613 = vmul.f32 %v2606, 1.442695
      %v2614 = vpow.pop %v2613
      %v2615 = vsel %vm487, %v2608, 0.0
      %2616 = vadd.xlane.f32.xlu0 %v2615
      %v2617 = vpop.xlane.xlu0 %2616
      %v2618 = vsel %vm487, %v2610, 0.0
      %2619 = vadd.xlane.f32.xlu0 %v2618
      %v2620 = vpop.xlane.xlu0 %2619
      %v2621 = vsel %vm487, %v2612, 0.0
      %2622 = vadd.xlane.f32.xlu0 %v2621
      %v2623 = vpop.xlane.xlu0 %2622
      %v2624 = vsel %vm487, %v2614, 0.0
      %2625 = vadd.xlane.f32.xlu0 %v2624
      %v2626 = vpop.xlane.xlu0 %2625
      %v2627 = vrcp.pop %v2617
      %v2628 = vrcp.pop %v2620
      %v2629 = vrcp.pop %v2623
      %v2630 = vrcp.pop %v2626
      %v2631 = vmul.f32 %v2608, %v2627
      %v2632 = vmul.f32 %v2610, %v2628
      %v2633 = vmul.f32 %v2612, %v2629
      %v2634 = vmul.f32 %v2614, %v2630
      %v2635 = vld [vmem:[%s6] sm:$0xff]
      %v2636 = vld [vmem:[%s6 + $0x8] sm:$0xff]
      %v2637 = vld [vmem:[%s6 + $0x10] sm:$0xff]
      %v2638 = vld [vmem:[%s6 + $0x18] sm:$0xff]
      %v2640 = vsel %vm487, %v2635, 0
      %v2643 = vsel %vm487, %v2636, 0
      %v2646 = vsel %vm487, %v2637, 0
      %v2649 = vsel %vm487, %v2638, 0
      %2651 = vmatpush.msra.mxu0 0.0
      %2652 = vmatpush.msra.mxu0 0.0
      %2653 = vmatpush.msra.mxu0 0.0
      %2654 = vmatpush.msra.mxu0 0.0
      %2655 = vmatpush.msra.mxu0 0.0
      %2656 = vmatpush.msra.mxu0 0.0
      %2657 = vmatpush.msra.mxu0 0.0
      %2658 = vmatpush.msra.mxu0 0.0
      %2659 = vmatpush.msra.mxu0 0.0
      %2660 = vmatpush.msra.mxu0 0.0
      %2661 = vmatpush.msra.mxu0 0.0
      %2662 = vmatpush.msra.mxu0 0.0
      %2663 = vmatpush.msra.mxu0 %v2634
      %2664 = vmatpush.msra.mxu0 %v2633
      %2665 = vmatpush.msra.mxu0 %v2632
      %2666 = vmatpush.msra.mxu0 %v2631
      %2667 = vmatmul.f32.gmra.mxu0 %v2640
      %v2668 = vpop.f32.mrf.mxu0
      %v2669 = vadd.f32 0.0, %v2668
      %2670 = vmatmul.f32.gmra.mxu0 %v2643
      %v2671 = vpop.f32.mrf.mxu0
      %v2672 = vadd.f32 0.0, %v2671
      %2673 = vmatmul.f32.gmra.mxu0 %v2646
      %v2674 = vpop.f32.mrf.mxu0
      %v2675 = vadd.f32 0.0, %v2674
      %2676 = vmatmul.f32.gmra.mxu0 %v2649
      %v2677 = vpop.f32.mrf.mxu0
      %v2678 = vadd.f32 0.0, %v2677
      %2679 = vdwg.mxu0
      %v2680 = vpack.c.bf16 %v2672, %v2669
      %v2681 = vpack.c.bf16 %v2678, %v2675
      %v2682 = vpack.c.bf16 %v2371, %v2369
      %v2683 = vpack.c.bf16 %v2372, %v2370
      %v2684 = vpack.c.bf16 %v2375, %v2373
      %v2685 = vpack.c.bf16 %v2376, %v2374
      %v2686 = vld [vmem:[%s7] sm:$0xff]
      %v2687 = vld [vmem:[%s7 + $0x8] sm:$0xff]
      %v2688 = vld [vmem:[%s7 + $0x10] sm:$0xff]
      %v2689 = vld [vmem:[%s7 + $0x18] sm:$0xff]
      %2691 = vset.pattern.permute.xlu0 0
      %2692 = vperm.xlu0 %2691, %v2686
      %v2693 = vpop.permute.xlu0 %2692
      %2696 = vset.pattern.permute.xlu0 0
      %2697 = vperm.xlu0 %2696, %v2687
      %v2698 = vpop.permute.xlu0 %2697
      %2701 = vset.pattern.permute.xlu0 0
      %2702 = vperm.xlu0 %2701, %v2688
      %v2703 = vpop.permute.xlu0 %2702
      %2706 = vset.pattern.permute.xlu0 0
      %2707 = vperm.xlu0 %2706, %v2689
      %v2708 = vpop.permute.xlu0 %2707
      %v2711 = vsel %vm487, %v2680, 0
      %v2714 = vsel %vm487, %v2681, 0
      %2716 = vmatpush.bf16.msra.mxu0 0
      %2717 = vmatpush.bf16.msra.mxu0 0
      %2718 = vmatpush.bf16.msra.mxu0 0
      %2719 = vmatpush.bf16.msra.mxu0 0
      %2720 = vmatpush.bf16.msra.mxu0 0
      %2721 = vmatpush.bf16.msra.mxu0 0
      %2722 = vmatpush.bf16.msra.mxu0 %v2684
      %2723 = vmatpush.bf16.msra.mxu0 %v2682
      %2724 = vmatmul.bf16.gmra.mxu0 %v2711
      %v2725 = vpop.f32.mrf.mxu0
      %v2726 = vadd.f32 %v2693, %v2725
      %v2727 = vpop.f32.mrf.mxu0
      %v2728 = vadd.f32 %v2698, %v2727
      %2729 = vmatmul.bf16.gmra.mxu0 %v2714
      %v2730 = vpop.f32.mrf.mxu0
      %v2731 = vadd.f32 %v2703, %v2730
      %v2732 = vpop.f32.mrf.mxu0
      %v2733 = vadd.f32 %v2708, %v2732
      %2734 = vdwg.mxu0
      %2735 = vmatpush.bf16.msra.mxu0 0
      %2736 = vmatpush.bf16.msra.mxu0 0
      %2737 = vmatpush.bf16.msra.mxu0 0
      %2738 = vmatpush.bf16.msra.mxu0 0
      %2739 = vmatpush.bf16.msra.mxu0 0
      %2740 = vmatpush.bf16.msra.mxu0 0
      %2741 = vmatpush.bf16.msra.mxu0 %v2685
      %2742 = vmatpush.bf16.msra.mxu0 %v2683
      %2743 = vmatmul.bf16.gmra.mxu0 %v2711
      %v2744 = vpop.f32.mrf.mxu0
      %v2745 = vadd.f32 %v2693, %v2744
      %v2746 = vpop.f32.mrf.mxu0
      %v2747 = vadd.f32 %v2698, %v2746
      %2748 = vmatmul.bf16.gmra.mxu0 %v2714
      %v2749 = vpop.f32.mrf.mxu0
      %v2750 = vadd.f32 %v2703, %v2749
      %v2751 = vpop.f32.mrf.mxu0
      %v2752 = vadd.f32 %v2708, %v2751
      %2753 = vdwg.mxu0
      %2754 = vst [vmem:[%s359] sm:$0xff] %v2726
      %2755 = vst [vmem:[%s359 + $0x8] sm:$0xff] %v2745
      %2756 = vst [vmem:[%s359 + $0x10] sm:$0xff] %v2728
      %2757 = vst [vmem:[%s359 + $0x18] sm:$0xff] %v2747
      %2758 = vst [vmem:[%s359 + $0x20] sm:$0xff] %v2731
      %2759 = vst [vmem:[%s359 + $0x28] sm:$0xff] %v2750
      %2760 = vst [vmem:[%s359 + $0x30] sm:$0xff] %v2733
      %2761 = vst [vmem:[%s359 + $0x38] sm:$0xff] %v2752
      %p2762 = scmp.lt.s32.totalorder %s21, 1
      %s2763 = scalar_select %p2762, %s21, 1
      %s2764 = smul.addr %s2763, 8
      %s2765 = smul.addr %s2764, 8
      %s2766 = scalar_lea.vmem %s10, %s2765
      // Predicated region
      $region61: #{_lambda_.1} parent=59 // pred_check
        %p2767 = pneg %p254
      $region62: #{_lambda_.1} parent=59 // pred_check_branch
        %2769 = sbr.rel (%p2767) target = $region64
      $region63: #{_lambda_.1} parent=59 // pred_region
        _
      $region64: #{_lambda_.1} parent=59 // pred_fallthru
        _
    $region60: #{_lambda_.1} parent=5 // pred_fallthru
      _
    %p2770 = scmp.le.s32.totalorder 2, %s16
    // Predicated region
    $region65: #{_lambda_.1} parent=5 // pred_check
      %p2771 = pneg %p2770
    $region66: #{_lambda_.1} parent=5 // pred_check_branch
      %2773 = sbr.rel (%p2771) target = $region68
    $region67: #{_lambda_.1} parent=5 // pred_region
      %s2774 = ssub.s32 %s16, 2
      // Predicated region
      $region69: #{_lambda_.1} parent=67 // pred_check
        %p2775 = pneg %p260
      $region70: #{_lambda_.1} parent=67 // pred_check_branch
        %2777 = sbr.rel (%p2775) target = $region72
      $region71: #{_lambda_.1} parent=67 // pred_region
        %p2778 = scmp.lt.s32.totalorder %s22, 1
        %s2779 = scalar_select %p2778, %s22, 1
        %s2780 = smul.addr %s2779, 8
        %s2781 = smul.addr %s2780, 8
        %s2782 = scalar_lea.vmem %s10, %s2781
      $region72: #{_lambda_.1} parent=67 // pred_fallthru
        _
    $region68: #{_lambda_.1} parent=5 // pred_fallthru
      _
  $region6: #{_lambda_.1} parent=0 // loop_footer
    %s20 = sadd.s32 1, %s16
  $region7: #{_lambda_.1} parent=0 // loop_footer_branch
    %15 = sbr.rel target = $region3
  $region8: #{_lambda_.1} parent=0 // loop_exit
    _

</llo_original>
